<compile_context>
chip_gen: v5e
topology: v5e:2x2
jax: 0.10.0
libtpu: 0.0.40
codegen_flags: <defaults>
</compile_context>

<pallas_src>
import math
import functools

import numpy as np
import jax
import jax.numpy as jnp
from jax.experimental import pallas as pl
from jax.experimental.pallas import tpu as pltpu

NEG_INF = -1e30   # additive key-padding mask (exp underflows to exactly 0);
                  # stands in for torch's masked_fill(-inf) without NaN risk.


# ---------------- Pallas kernel ------------------------------------------------
def _mha_kernel(q_ref, k_ref, v_ref, mask_ref,
                wq_ref, wk_ref, wv_ref, wo_ref, bo_ref,
                o_ref, *, batch, seq, num_heads, head_dim):
    """Fused multi-head attention for the whole (flattened) batch.

    q_ref/k_ref/v_ref : (B*T, H)      activations, batch*time on sublanes
    mask_ref          : (B, 1, T)     additive key-padding bias (0 or -1e30)
    wq/wk/wv_ref      : (nh, H, dh)   per-head projection weights
    wo_ref            : (nh, dh, Hp)  per-head output projection (lane-padded)
    bo_ref            : (1, Hp)       output bias (lane-padded)
    o_ref             : (B*T, Hp)     lane-dense output slab
    """
    scale = 1.0 / math.sqrt(head_dim)
    hpad = o_ref.shape[1]

    for b in range(batch):                       # static unroll over batch
        lo = b * seq
        qb = q_ref[lo:lo + seq, :]               # (T, H) sublane-aligned slice
        kb = k_ref[lo:lo + seq, :]
        vb = v_ref[lo:lo + seq, :]
        mb = mask_ref[b]                         # (1, T) broadcast over queries

        # accumulate bias + sum_h ctx_h @ Wo_h  (== concat(ctx) @ Wo + bo)
        acc = jnp.broadcast_to(bo_ref[...], (seq, hpad))

        for h in range(num_heads):               # static unroll over heads
            qh = jnp.dot(qb, wq_ref[h], preferred_element_type=jnp.float32)
            kh = jnp.dot(kb, wk_ref[h], preferred_element_type=jnp.float32)
            vh = jnp.dot(vb, wv_ref[h], preferred_element_type=jnp.float32)

            # scores = qh @ kh^T / sqrt(dh)  (contract last dims, no transpose)
            s = jax.lax.dot_general(qh, kh, (((1,), (1,)), ((), ())),
                                    preferred_element_type=jnp.float32) * scale
            s = s + mb                           # mask padded keys

            m = jnp.max(s, axis=-1, keepdims=True)
            p = jnp.exp(s - m)
            denom = jnp.sum(p, axis=-1, keepdims=True)
            p = p * pl.reciprocal(denom, approx=True)   # EUP, not VALU divide
            # (dropout on p is identity in eval mode)

            ctx = jnp.dot(p, vh, preferred_element_type=jnp.float32)   # (T, dh)
            acc = acc + jnp.dot(ctx, wo_ref[h],
                                preferred_element_type=jnp.float32)    # (T, Hp)

        o_ref[lo:lo + seq, :] = acc              # full-lane (8,128) store


# ---------------- wrapper -------------------------------------------------------
@functools.partial(jax.jit, static_argnames=("num_header",))
def mha_forward(q, k, v, input_length, wq, wk, wv, wo, bo, *, num_header):
    """q, k, v: (B, T, H) float32; input_length: (B,) int32 valid key lengths.

    Weights are in (in, out) layout (i.e. transposed from PyTorch), so
    projections are y = x @ W (+ b).
    """
    B, T, H = q.shape
    nh = num_header
    dh = H // nh
    hpad = ((H + 127) // 128) * 128              # lane-dense output width

    # per-head weight layout: head h uses output cols [h*dh:(h+1)*dh] of Wq/Wk/Wv
    # and input rows [h*dh:(h+1)*dh] of Wo.  Done once in XLA, outside the kernel.
    wq_h = jnp.transpose(wq.reshape(H, nh, dh), (1, 0, 2))          # (nh, H, dh)
    wk_h = jnp.transpose(wk.reshape(H, nh, dh), (1, 0, 2))
    wv_h = jnp.transpose(wv.reshape(H, nh, dh), (1, 0, 2))
    wo_h = jnp.pad(wo.reshape(nh, dh, H), ((0, 0), (0, 0), (0, hpad - H)))
    bo_p = jnp.pad(bo, (0, hpad - H)).reshape(1, hpad)

    # additive key-padding mask bias: 0 for valid keys, NEG_INF otherwise
    key_idx = jnp.arange(T, dtype=jnp.int32)[None, :]
    mask_bias = jnp.where(key_idx < input_length[:, None],
                          0.0, NEG_INF).astype(jnp.float32)[:, None, :]   # (B,1,T)

    # flatten (B, T) onto the sublane axis
    q2 = q.reshape(B * T, H)
    k2 = k.reshape(B * T, H)
    v2 = v.reshape(B * T, H)

    kern = functools.partial(_mha_kernel, batch=B, seq=T,
                             num_heads=nh, head_dim=dh)
    vmem = pl.BlockSpec(memory_space=pltpu.MemorySpace.VMEM)

    out = pl.pallas_call(
        kern,
        out_shape=jax.ShapeDtypeStruct((B * T, hpad), jnp.float32),
        in_specs=[vmem] * 9,
        out_specs=vmem,
    )(q2, k2, v2, mask_bias, wq_h, wk_h, wv_h, wo_h, bo_p)

    return out[:, :H].reshape(B, T, H)


# ---------------- parameter init (matches nn.Linear / xavier_uniform_) ---------
def init_params(key, hidden, num_header):
    def xavier(k, fan_in, fan_out):
        lim = math.sqrt(6.0 / (fan_in + fan_out))
        return jax.random.uniform(k, (fan_in, fan_out), jnp.float32, -lim, lim)

    k1, k2, k3, k4, k5 = jax.random.split(key, 5)
    lim_b = 1.0 / math.sqrt(hidden)
    return {
        "wq": xavier(k1, hidden, hidden),
        "wk": xavier(k2, hidden, hidden),
        "wv": xavier(k3, hidden, hidden),
        "wo": xavier(k4, hidden, hidden),
        "bo": jax.random.uniform(k5, (hidden,), jnp.float32, -lim_b, lim_b),
    }


# ---------------- pure-JAX reference (mirrors the PyTorch module) ---------------
def mha_ref(q, k, v, input_length, wq, wk, wv, wo, bo, *, num_header):
    B, T, H = q.shape
    dh = H // num_header
    Q = (q @ wq).reshape(B, T, num_header, dh).transpose(0, 2, 1, 3)
    K = (k @ wk).reshape(B, T, num_header, dh).transpose(0, 2, 1, 3)
    V = (v @ wv).reshape(B, T, num_header, dh).transpose(0, 2, 1, 3)
    s = jnp.einsum("bhqd,bhkd->bhqk", Q, K) / math.sqrt(dh)
    key_mask = jnp.arange(T)[None, :] >= input_length[:, None]        # True = pad
    s = jnp.where(key_mask[:, None, None, :], NEG_INF, s)
    p = jax.nn.softmax(s, axis=-1)                                    # dropout = id (eval)
    ctx = jnp.einsum("bhqk,bhkd->bhqd", p, V).transpose(0, 2, 1, 3).reshape(B, T, H)
    return ctx @ wo + bo


# ---------------- main ----------------------------------------------------------
if __name__ == "__main__":
    key = jax.random.PRNGKey(0)
    kq, kk, kv, kp = jax.random.split(key, 4)

    B, T, H, NH = 2, 8, 32, 4
    params = init_params(kp, H, NH)

    q = jax.random.normal(kq, (B, T, H), jnp.float32)
    k = jax.random.normal(kk, (B, T, H), jnp.float32)
    v = jax.random.normal(kv, (B, T, H), jnp.float32)
    input_length = jnp.array([8, 5], dtype=jnp.int32)

    out = mha_forward(q, k, v, input_length,
                      params["wq"], params["wk"], params["wv"],
                      params["wo"], params["bo"], num_header=NH)
    out = jax.block_until_ready(out)

    ref = mha_ref(q, k, v, input_length,
                  params["wq"], params["wk"], params["wv"],
                  params["wo"], params["bo"], num_header=NH)

    assert out.shape == (B, T, H)
    # tolerance accounts for the approximate EUP reciprocal in the softmax
    assert np.allclose(np.asarray(out), np.asarray(ref), atol=5e-3, rtol=5e-3)
    print("KERNEL_OK")
</pallas_src>

<mosaic_0001>
module attributes {stable_mosaic.version = 11 : i64} {
  func.func @_mha_kernel(%arg0: memref<16x32xf32, #tpu.memory_space<vmem>>, %arg1: memref<16x32xf32, #tpu.memory_space<vmem>>, %arg2: memref<16x32xf32, #tpu.memory_space<vmem>>, %arg3: memref<2x1x8xf32, #tpu.memory_space<vmem>>, %arg4: memref<4x32x8xf32, #tpu.memory_space<vmem>>, %arg5: memref<4x32x8xf32, #tpu.memory_space<vmem>>, %arg6: memref<4x32x8xf32, #tpu.memory_space<vmem>>, %arg7: memref<4x8x128xf32, #tpu.memory_space<vmem>>, %arg8: memref<1x128xf32, #tpu.memory_space<vmem>>, %arg9: memref<16x128xf32, #tpu.memory_space<vmem>>) attributes {dimension_semantics = [], scalar_prefetch = 0 : i64, scratch_operands = 0 : i64, tpu.core_type = #tpu.core_type<tc>} {
    %c0 = arith.constant 0 : index
    %c0_0 = arith.constant 0 : index
    %0 = vector.load %arg0[%c0, %c0_0] : memref<16x32xf32, #tpu.memory_space<vmem>>, vector<8x32xf32>
    %c0_1 = arith.constant 0 : index
    %c0_2 = arith.constant 0 : index
    %1 = vector.load %arg1[%c0_1, %c0_2] : memref<16x32xf32, #tpu.memory_space<vmem>>, vector<8x32xf32>
    %c0_3 = arith.constant 0 : index
    %c0_4 = arith.constant 0 : index
    %2 = vector.load %arg2[%c0_3, %c0_4] : memref<16x32xf32, #tpu.memory_space<vmem>>, vector<8x32xf32>
    %c0_5 = arith.constant 0 : index
    %c0_6 = arith.constant 0 : index
    %c0_7 = arith.constant 0 : index
    %3 = vector.load %arg3[%c0_5, %c0_6, %c0_7] : memref<2x1x8xf32, #tpu.memory_space<vmem>>, vector<1x1x8xf32>
    %4 = vector.shape_cast %3 : vector<1x1x8xf32> to vector<1x8xf32>
    %c0_8 = arith.constant 0 : index
    %c0_9 = arith.constant 0 : index
    %5 = vector.load %arg8[%c0_8, %c0_9] : memref<1x128xf32, #tpu.memory_space<vmem>>, vector<1x128xf32>
    %6 = vector.shape_cast %5 : vector<1x128xf32> to vector<1x128xf32>
    %7 = vector.broadcast %6 : vector<1x128xf32> to vector<8x128xf32>
    %c0_10 = arith.constant 0 : index
    %c0_11 = arith.constant 0 : index
    %c0_12 = arith.constant 0 : index
    %8 = vector.load %arg4[%c0_10, %c0_11, %c0_12] : memref<4x32x8xf32, #tpu.memory_space<vmem>>, vector<1x32x8xf32>
    %9 = vector.shape_cast %8 : vector<1x32x8xf32> to vector<32x8xf32>
    %cst = arith.constant dense<0.000000e+00> : vector<8x8xf32>
    %10 = tpu.matmul %0, %9, %cst {dimension_numbers = #tpu.dot_dimension_numbers<[1], [0], [0], [1], [0, 0, 1, 1], [], []>} : vector<8x32xf32>, vector<32x8xf32>, vector<8x8xf32> -> vector<8x8xf32>
    %c0_13 = arith.constant 0 : index
    %c0_14 = arith.constant 0 : index
    %c0_15 = arith.constant 0 : index
    %11 = vector.load %arg5[%c0_13, %c0_14, %c0_15] : memref<4x32x8xf32, #tpu.memory_space<vmem>>, vector<1x32x8xf32>
    %12 = vector.shape_cast %11 : vector<1x32x8xf32> to vector<32x8xf32>
    %cst_16 = arith.constant dense<0.000000e+00> : vector<8x8xf32>
    %13 = tpu.matmul %1, %12, %cst_16 {dimension_numbers = #tpu.dot_dimension_numbers<[1], [0], [0], [1], [0, 0, 1, 1], [], []>} : vector<8x32xf32>, vector<32x8xf32>, vector<8x8xf32> -> vector<8x8xf32>
    %c0_17 = arith.constant 0 : index
    %c0_18 = arith.constant 0 : index
    %c0_19 = arith.constant 0 : index
    %14 = vector.load %arg6[%c0_17, %c0_18, %c0_19] : memref<4x32x8xf32, #tpu.memory_space<vmem>>, vector<1x32x8xf32>
    %15 = vector.shape_cast %14 : vector<1x32x8xf32> to vector<32x8xf32>
    %cst_20 = arith.constant dense<0.000000e+00> : vector<8x8xf32>
    %16 = tpu.matmul %2, %15, %cst_20 {dimension_numbers = #tpu.dot_dimension_numbers<[1], [0], [0], [1], [0, 0, 1, 1], [], []>} : vector<8x32xf32>, vector<32x8xf32>, vector<8x8xf32> -> vector<8x8xf32>
    %cst_21 = arith.constant dense<0.000000e+00> : vector<8x8xf32>
    %17 = tpu.matmul %10, %13, %cst_21 {dimension_numbers = #tpu.dot_dimension_numbers<[1], [1], [0], [0], [0, 0, 1, 0], [], []>} : vector<8x8xf32>, vector<8x8xf32>, vector<8x8xf32> -> vector<8x8xf32>
    %cst_22 = arith.constant 0.353553385 : f32
    %18 = vector.broadcast %cst_22 : f32 to vector<8x8xf32>
    %19 = arith.mulf %17, %18 : vector<8x8xf32>
    %20 = vector.broadcast %4 : vector<1x8xf32> to vector<8x8xf32>
    %21 = arith.addf %19, %20 : vector<8x8xf32>
    %cst_23 = arith.constant dense<0xFF800000> : vector<8xf32>
    %22 = vector.multi_reduction <maximumf>, %21, %cst_23 [1] : vector<8x8xf32> to vector<8xf32>
    %23 = vector.shape_cast %22 : vector<8xf32> to vector<8x1xf32>
    %24 = vector.broadcast %23 : vector<8x1xf32> to vector<8x8xf32>
    %25 = arith.subf %21, %24 : vector<8x8xf32>
    %26 = math.exp %25 : vector<8x8xf32>
    %cst_24 = arith.constant dense<0.000000e+00> : vector<8xf32>
    %27 = vector.multi_reduction <add>, %26, %cst_24 [1] : vector<8x8xf32> to vector<8xf32>
    %28 = vector.shape_cast %27 : vector<8xf32> to vector<8x1xf32>
    %29 = tpu.reciprocal %28 {approx = true} : vector<8x1xf32> -> vector<8x1xf32>
    %30 = vector.broadcast %29 : vector<8x1xf32> to vector<8x8xf32>
    %31 = arith.mulf %26, %30 : vector<8x8xf32>
    %cst_25 = arith.constant dense<0.000000e+00> : vector<8x8xf32>
    %32 = tpu.matmul %31, %16, %cst_25 {dimension_numbers = #tpu.dot_dimension_numbers<[1], [0], [0], [1], [0, 0, 1, 1], [], []>} : vector<8x8xf32>, vector<8x8xf32>, vector<8x8xf32> -> vector<8x8xf32>
    %c0_26 = arith.constant 0 : index
    %c0_27 = arith.constant 0 : index
    %c0_28 = arith.constant 0 : index
    %33 = vector.load %arg7[%c0_26, %c0_27, %c0_28] : memref<4x8x128xf32, #tpu.memory_space<vmem>>, vector<1x8x128xf32>
    %34 = vector.shape_cast %33 : vector<1x8x128xf32> to vector<8x128xf32>
    %cst_29 = arith.constant dense<0.000000e+00> : vector<8x128xf32>
    %35 = tpu.matmul %32, %34, %cst_29 {dimension_numbers = #tpu.dot_dimension_numbers<[1], [0], [0], [1], [0, 0, 1, 1], [], []>} : vector<8x8xf32>, vector<8x128xf32>, vector<8x128xf32> -> vector<8x128xf32>
    %36 = arith.addf %7, %35 : vector<8x128xf32>
    %c1 = arith.constant 1 : index
    %c0_30 = arith.constant 0 : index
    %c0_31 = arith.constant 0 : index
    %37 = vector.load %arg4[%c1, %c0_30, %c0_31] : memref<4x32x8xf32, #tpu.memory_space<vmem>>, vector<1x32x8xf32>
    %38 = vector.shape_cast %37 : vector<1x32x8xf32> to vector<32x8xf32>
    %cst_32 = arith.constant dense<0.000000e+00> : vector<8x8xf32>
    %39 = tpu.matmul %0, %38, %cst_32 {dimension_numbers = #tpu.dot_dimension_numbers<[1], [0], [0], [1], [0, 0, 1, 1], [], []>} : vector<8x32xf32>, vector<32x8xf32>, vector<8x8xf32> -> vector<8x8xf32>
    %c1_33 = arith.constant 1 : index
    %c0_34 = arith.constant 0 : index
    %c0_35 = arith.constant 0 : index
    %40 = vector.load %arg5[%c1_33, %c0_34, %c0_35] : memref<4x32x8xf32, #tpu.memory_space<vmem>>, vector<1x32x8xf32>
    %41 = vector.shape_cast %40 : vector<1x32x8xf32> to vector<32x8xf32>
    %cst_36 = arith.constant dense<0.000000e+00> : vector<8x8xf32>
    %42 = tpu.matmul %1, %41, %cst_36 {dimension_numbers = #tpu.dot_dimension_numbers<[1], [0], [0], [1], [0, 0, 1, 1], [], []>} : vector<8x32xf32>, vector<32x8xf32>, vector<8x8xf32> -> vector<8x8xf32>
    %c1_37 = arith.constant 1 : index
    %c0_38 = arith.constant 0 : index
    %c0_39 = arith.constant 0 : index
    %43 = vector.load %arg6[%c1_37, %c0_38, %c0_39] : memref<4x32x8xf32, #tpu.memory_space<vmem>>, vector<1x32x8xf32>
    %44 = vector.shape_cast %43 : vector<1x32x8xf32> to vector<32x8xf32>
    %cst_40 = arith.constant dense<0.000000e+00> : vector<8x8xf32>
    %45 = tpu.matmul %2, %44, %cst_40 {dimension_numbers = #tpu.dot_dimension_numbers<[1], [0], [0], [1], [0, 0, 1, 1], [], []>} : vector<8x32xf32>, vector<32x8xf32>, vector<8x8xf32> -> vector<8x8xf32>
    %cst_41 = arith.constant dense<0.000000e+00> : vector<8x8xf32>
    %46 = tpu.matmul %39, %42, %cst_41 {dimension_numbers = #tpu.dot_dimension_numbers<[1], [1], [0], [0], [0, 0, 1, 0], [], []>} : vector<8x8xf32>, vector<8x8xf32>, vector<8x8xf32> -> vector<8x8xf32>
    %cst_42 = arith.constant 0.353553385 : f32
    %47 = vector.broadcast %cst_42 : f32 to vector<8x8xf32>
    %48 = arith.mulf %46, %47 : vector<8x8xf32>
    %49 = vector.broadcast %4 : vector<1x8xf32> to vector<8x8xf32>
    %50 = arith.addf %48, %49 : vector<8x8xf32>
    %cst_43 = arith.constant dense<0xFF800000> : vector<8xf32>
    %51 = vector.multi_reduction <maximumf>, %50, %cst_43 [1] : vector<8x8xf32> to vector<8xf32>
    %52 = vector.shape_cast %51 : vector<8xf32> to vector<8x1xf32>
    %53 = vector.broadcast %52 : vector<8x1xf32> to vector<8x8xf32>
    %54 = arith.subf %50, %53 : vector<8x8xf32>
    %55 = math.exp %54 : vector<8x8xf32>
    %cst_44 = arith.constant dense<0.000000e+00> : vector<8xf32>
    %56 = vector.multi_reduction <add>, %55, %cst_44 [1] : vector<8x8xf32> to vector<8xf32>
    %57 = vector.shape_cast %56 : vector<8xf32> to vector<8x1xf32>
    %58 = tpu.reciprocal %57 {approx = true} : vector<8x1xf32> -> vector<8x1xf32>
    %59 = vector.broadcast %58 : vector<8x1xf32> to vector<8x8xf32>
    %60 = arith.mulf %55, %59 : vector<8x8xf32>
    %cst_45 = arith.constant dense<0.000000e+00> : vector<8x8xf32>
    %61 = tpu.matmul %60, %45, %cst_45 {dimension_numbers = #tpu.dot_dimension_numbers<[1], [0], [0], [1], [0, 0, 1, 1], [], []>} : vector<8x8xf32>, vector<8x8xf32>, vector<8x8xf32> -> vector<8x8xf32>
    %c1_46 = arith.constant 1 : index
    %c0_47 = arith.constant 0 : index
    %c0_48 = arith.constant 0 : index
    %62 = vector.load %arg7[%c1_46, %c0_47, %c0_48] : memref<4x8x128xf32, #tpu.memory_space<vmem>>, vector<1x8x128xf32>
    %63 = vector.shape_cast %62 : vector<1x8x128xf32> to vector<8x128xf32>
    %cst_49 = arith.constant dense<0.000000e+00> : vector<8x128xf32>
    %64 = tpu.matmul %61, %63, %cst_49 {dimension_numbers = #tpu.dot_dimension_numbers<[1], [0], [0], [1], [0, 0, 1, 1], [], []>} : vector<8x8xf32>, vector<8x128xf32>, vector<8x128xf32> -> vector<8x128xf32>
    %65 = arith.addf %36, %64 : vector<8x128xf32>
    %c2 = arith.constant 2 : index
    %c0_50 = arith.constant 0 : index
    %c0_51 = arith.constant 0 : index
    %66 = vector.load %arg4[%c2, %c0_50, %c0_51] : memref<4x32x8xf32, #tpu.memory_space<vmem>>, vector<1x32x8xf32>
    %67 = vector.shape_cast %66 : vector<1x32x8xf32> to vector<32x8xf32>
    %cst_52 = arith.constant dense<0.000000e+00> : vector<8x8xf32>
    %68 = tpu.matmul %0, %67, %cst_52 {dimension_numbers = #tpu.dot_dimension_numbers<[1], [0], [0], [1], [0, 0, 1, 1], [], []>} : vector<8x32xf32>, vector<32x8xf32>, vector<8x8xf32> -> vector<8x8xf32>
    %c2_53 = arith.constant 2 : index
    %c0_54 = arith.constant 0 : index
    %c0_55 = arith.constant 0 : index
    %69 = vector.load %arg5[%c2_53, %c0_54, %c0_55] : memref<4x32x8xf32, #tpu.memory_space<vmem>>, vector<1x32x8xf32>
    %70 = vector.shape_cast %69 : vector<1x32x8xf32> to vector<32x8xf32>
    %cst_56 = arith.constant dense<0.000000e+00> : vector<8x8xf32>
    %71 = tpu.matmul %1, %70, %cst_56 {dimension_numbers = #tpu.dot_dimension_numbers<[1], [0], [0], [1], [0, 0, 1, 1], [], []>} : vector<8x32xf32>, vector<32x8xf32>, vector<8x8xf32> -> vector<8x8xf32>
    %c2_57 = arith.constant 2 : index
    %c0_58 = arith.constant 0 : index
    %c0_59 = arith.constant 0 : index
    %72 = vector.load %arg6[%c2_57, %c0_58, %c0_59] : memref<4x32x8xf32, #tpu.memory_space<vmem>>, vector<1x32x8xf32>
    %73 = vector.shape_cast %72 : vector<1x32x8xf32> to vector<32x8xf32>
    %cst_60 = arith.constant dense<0.000000e+00> : vector<8x8xf32>
    %74 = tpu.matmul %2, %73, %cst_60 {dimension_numbers = #tpu.dot_dimension_numbers<[1], [0], [0], [1], [0, 0, 1, 1], [], []>} : vector<8x32xf32>, vector<32x8xf32>, vector<8x8xf32> -> vector<8x8xf32>
    %cst_61 = arith.constant dense<0.000000e+00> : vector<8x8xf32>
    %75 = tpu.matmul %68, %71, %cst_61 {dimension_numbers = #tpu.dot_dimension_numbers<[1], [1], [0], [0], [0, 0, 1, 0], [], []>} : vector<8x8xf32>, vector<8x8xf32>, vector<8x8xf32> -> vector<8x8xf32>
    %cst_62 = arith.constant 0.353553385 : f32
    %76 = vector.broadcast %cst_62 : f32 to vector<8x8xf32>
    %77 = arith.mulf %75, %76 : vector<8x8xf32>
    %78 = vector.broadcast %4 : vector<1x8xf32> to vector<8x8xf32>
    %79 = arith.addf %77, %78 : vector<8x8xf32>
    %cst_63 = arith.constant dense<0xFF800000> : vector<8xf32>
    %80 = vector.multi_reduction <maximumf>, %79, %cst_63 [1] : vector<8x8xf32> to vector<8xf32>
    %81 = vector.shape_cast %80 : vector<8xf32> to vector<8x1xf32>
    %82 = vector.broadcast %81 : vector<8x1xf32> to vector<8x8xf32>
    %83 = arith.subf %79, %82 : vector<8x8xf32>
    %84 = math.exp %83 : vector<8x8xf32>
    %cst_64 = arith.constant dense<0.000000e+00> : vector<8xf32>
    %85 = vector.multi_reduction <add>, %84, %cst_64 [1] : vector<8x8xf32> to vector<8xf32>
    %86 = vector.shape_cast %85 : vector<8xf32> to vector<8x1xf32>
    %87 = tpu.reciprocal %86 {approx = true} : vector<8x1xf32> -> vector<8x1xf32>
    %88 = vector.broadcast %87 : vector<8x1xf32> to vector<8x8xf32>
    %89 = arith.mulf %84, %88 : vector<8x8xf32>
    %cst_65 = arith.constant dense<0.000000e+00> : vector<8x8xf32>
    %90 = tpu.matmul %89, %74, %cst_65 {dimension_numbers = #tpu.dot_dimension_numbers<[1], [0], [0], [1], [0, 0, 1, 1], [], []>} : vector<8x8xf32>, vector<8x8xf32>, vector<8x8xf32> -> vector<8x8xf32>
    %c2_66 = arith.constant 2 : index
    %c0_67 = arith.constant 0 : index
    %c0_68 = arith.constant 0 : index
    %91 = vector.load %arg7[%c2_66, %c0_67, %c0_68] : memref<4x8x128xf32, #tpu.memory_space<vmem>>, vector<1x8x128xf32>
    %92 = vector.shape_cast %91 : vector<1x8x128xf32> to vector<8x128xf32>
    %cst_69 = arith.constant dense<0.000000e+00> : vector<8x128xf32>
    %93 = tpu.matmul %90, %92, %cst_69 {dimension_numbers = #tpu.dot_dimension_numbers<[1], [0], [0], [1], [0, 0, 1, 1], [], []>} : vector<8x8xf32>, vector<8x128xf32>, vector<8x128xf32> -> vector<8x128xf32>
    %94 = arith.addf %65, %93 : vector<8x128xf32>
    %c3 = arith.constant 3 : index
    %c0_70 = arith.constant 0 : index
    %c0_71 = arith.constant 0 : index
    %95 = vector.load %arg4[%c3, %c0_70, %c0_71] : memref<4x32x8xf32, #tpu.memory_space<vmem>>, vector<1x32x8xf32>
    %96 = vector.shape_cast %95 : vector<1x32x8xf32> to vector<32x8xf32>
    %cst_72 = arith.constant dense<0.000000e+00> : vector<8x8xf32>
    %97 = tpu.matmul %0, %96, %cst_72 {dimension_numbers = #tpu.dot_dimension_numbers<[1], [0], [0], [1], [0, 0, 1, 1], [], []>} : vector<8x32xf32>, vector<32x8xf32>, vector<8x8xf32> -> vector<8x8xf32>
    %c3_73 = arith.constant 3 : index
    %c0_74 = arith.constant 0 : index
    %c0_75 = arith.constant 0 : index
    %98 = vector.load %arg5[%c3_73, %c0_74, %c0_75] : memref<4x32x8xf32, #tpu.memory_space<vmem>>, vector<1x32x8xf32>
    %99 = vector.shape_cast %98 : vector<1x32x8xf32> to vector<32x8xf32>
    %cst_76 = arith.constant dense<0.000000e+00> : vector<8x8xf32>
    %100 = tpu.matmul %1, %99, %cst_76 {dimension_numbers = #tpu.dot_dimension_numbers<[1], [0], [0], [1], [0, 0, 1, 1], [], []>} : vector<8x32xf32>, vector<32x8xf32>, vector<8x8xf32> -> vector<8x8xf32>
    %c3_77 = arith.constant 3 : index
    %c0_78 = arith.constant 0 : index
    %c0_79 = arith.constant 0 : index
    %101 = vector.load %arg6[%c3_77, %c0_78, %c0_79] : memref<4x32x8xf32, #tpu.memory_space<vmem>>, vector<1x32x8xf32>
    %102 = vector.shape_cast %101 : vector<1x32x8xf32> to vector<32x8xf32>
    %cst_80 = arith.constant dense<0.000000e+00> : vector<8x8xf32>
    %103 = tpu.matmul %2, %102, %cst_80 {dimension_numbers = #tpu.dot_dimension_numbers<[1], [0], [0], [1], [0, 0, 1, 1], [], []>} : vector<8x32xf32>, vector<32x8xf32>, vector<8x8xf32> -> vector<8x8xf32>
    %cst_81 = arith.constant dense<0.000000e+00> : vector<8x8xf32>
    %104 = tpu.matmul %97, %100, %cst_81 {dimension_numbers = #tpu.dot_dimension_numbers<[1], [1], [0], [0], [0, 0, 1, 0], [], []>} : vector<8x8xf32>, vector<8x8xf32>, vector<8x8xf32> -> vector<8x8xf32>
    %cst_82 = arith.constant 0.353553385 : f32
    %105 = vector.broadcast %cst_82 : f32 to vector<8x8xf32>
    %106 = arith.mulf %104, %105 : vector<8x8xf32>
    %107 = vector.broadcast %4 : vector<1x8xf32> to vector<8x8xf32>
    %108 = arith.addf %106, %107 : vector<8x8xf32>
    %cst_83 = arith.constant dense<0xFF800000> : vector<8xf32>
    %109 = vector.multi_reduction <maximumf>, %108, %cst_83 [1] : vector<8x8xf32> to vector<8xf32>
    %110 = vector.shape_cast %109 : vector<8xf32> to vector<8x1xf32>
    %111 = vector.broadcast %110 : vector<8x1xf32> to vector<8x8xf32>
    %112 = arith.subf %108, %111 : vector<8x8xf32>
    %113 = math.exp %112 : vector<8x8xf32>
    %cst_84 = arith.constant dense<0.000000e+00> : vector<8xf32>
    %114 = vector.multi_reduction <add>, %113, %cst_84 [1] : vector<8x8xf32> to vector<8xf32>
    %115 = vector.shape_cast %114 : vector<8xf32> to vector<8x1xf32>
    %116 = tpu.reciprocal %115 {approx = true} : vector<8x1xf32> -> vector<8x1xf32>
    %117 = vector.broadcast %116 : vector<8x1xf32> to vector<8x8xf32>
    %118 = arith.mulf %113, %117 : vector<8x8xf32>
    %cst_85 = arith.constant dense<0.000000e+00> : vector<8x8xf32>
    %119 = tpu.matmul %118, %103, %cst_85 {dimension_numbers = #tpu.dot_dimension_numbers<[1], [0], [0], [1], [0, 0, 1, 1], [], []>} : vector<8x8xf32>, vector<8x8xf32>, vector<8x8xf32> -> vector<8x8xf32>
    %c3_86 = arith.constant 3 : index
    %c0_87 = arith.constant 0 : index
    %c0_88 = arith.constant 0 : index
    %120 = vector.load %arg7[%c3_86, %c0_87, %c0_88] : memref<4x8x128xf32, #tpu.memory_space<vmem>>, vector<1x8x128xf32>
    %121 = vector.shape_cast %120 : vector<1x8x128xf32> to vector<8x128xf32>
    %cst_89 = arith.constant dense<0.000000e+00> : vector<8x128xf32>
    %122 = tpu.matmul %119, %121, %cst_89 {dimension_numbers = #tpu.dot_dimension_numbers<[1], [0], [0], [1], [0, 0, 1, 1], [], []>} : vector<8x8xf32>, vector<8x128xf32>, vector<8x128xf32> -> vector<8x128xf32>
    %123 = arith.addf %94, %122 : vector<8x128xf32>
    %c0_90 = arith.constant 0 : index
    %c0_91 = arith.constant 0 : index
    %124 = vector.load %arg9[%c0_90, %c0_91] : memref<16x128xf32, #tpu.memory_space<vmem>>, vector<8x128xf32>
    tpu.vector_store %arg9[%c0_90, %c0_91], %123 {strides = array<i32>} : memref<16x128xf32, #tpu.memory_space<vmem>>, vector<8x128xf32>,
    %c8 = arith.constant 8 : index
    %c0_92 = arith.constant 0 : index
    %125 = vector.load %arg0[%c8, %c0_92] : memref<16x32xf32, #tpu.memory_space<vmem>>, vector<8x32xf32>
    %c8_93 = arith.constant 8 : index
    %c0_94 = arith.constant 0 : index
    %126 = vector.load %arg1[%c8_93, %c0_94] : memref<16x32xf32, #tpu.memory_space<vmem>>, vector<8x32xf32>
    %c8_95 = arith.constant 8 : index
    %c0_96 = arith.constant 0 : index
    %127 = vector.load %arg2[%c8_95, %c0_96] : memref<16x32xf32, #tpu.memory_space<vmem>>, vector<8x32xf32>
    %c1_97 = arith.constant 1 : index
    %c0_98 = arith.constant 0 : index
    %c0_99 = arith.constant 0 : index
    %128 = vector.load %arg3[%c1_97, %c0_98, %c0_99] : memref<2x1x8xf32, #tpu.memory_space<vmem>>, vector<1x1x8xf32>
    %129 = vector.shape_cast %128 : vector<1x1x8xf32> to vector<1x8xf32>
    %c0_100 = arith.constant 0 : index
    %c0_101 = arith.constant 0 : index
    %130 = vector.load %arg8[%c0_100, %c0_101] : memref<1x128xf32, #tpu.memory_space<vmem>>, vector<1x128xf32>
    %131 = vector.shape_cast %130 : vector<1x128xf32> to vector<1x128xf32>
    %132 = vector.broadcast %131 : vector<1x128xf32> to vector<8x128xf32>
    %c0_102 = arith.constant 0 : index
    %c0_103 = arith.constant 0 : index
    %c0_104 = arith.constant 0 : index
    %133 = vector.load %arg4[%c0_102, %c0_103, %c0_104] : memref<4x32x8xf32, #tpu.memory_space<vmem>>, vector<1x32x8xf32>
    %134 = vector.shape_cast %133 : vector<1x32x8xf32> to vector<32x8xf32>
    %cst_105 = arith.constant dense<0.000000e+00> : vector<8x8xf32>
    %135 = tpu.matmul %125, %134, %cst_105 {dimension_numbers = #tpu.dot_dimension_numbers<[1], [0], [0], [1], [0, 0, 1, 1], [], []>} : vector<8x32xf32>, vector<32x8xf32>, vector<8x8xf32> -> vector<8x8xf32>
    %c0_106 = arith.constant 0 : index
    %c0_107 = arith.constant 0 : index
    %c0_108 = arith.constant 0 : index
    %136 = vector.load %arg5[%c0_106, %c0_107, %c0_108] : memref<4x32x8xf32, #tpu.memory_space<vmem>>, vector<1x32x8xf32>
    %137 = vector.shape_cast %136 : vector<1x32x8xf32> to vector<32x8xf32>
    %cst_109 = arith.constant dense<0.000000e+00> : vector<8x8xf32>
    %138 = tpu.matmul %126, %137, %cst_109 {dimension_numbers = #tpu.dot_dimension_numbers<[1], [0], [0], [1], [0, 0, 1, 1], [], []>} : vector<8x32xf32>, vector<32x8xf32>, vector<8x8xf32> -> vector<8x8xf32>
    %c0_110 = arith.constant 0 : index
    %c0_111 = arith.constant 0 : index
    %c0_112 = arith.constant 0 : index
    %139 = vector.load %arg6[%c0_110, %c0_111, %c0_112] : memref<4x32x8xf32, #tpu.memory_space<vmem>>, vector<1x32x8xf32>
    %140 = vector.shape_cast %139 : vector<1x32x8xf32> to vector<32x8xf32>
    %cst_113 = arith.constant dense<0.000000e+00> : vector<8x8xf32>
    %141 = tpu.matmul %127, %140, %cst_113 {dimension_numbers = #tpu.dot_dimension_numbers<[1], [0], [0], [1], [0, 0, 1, 1], [], []>} : vector<8x32xf32>, vector<32x8xf32>, vector<8x8xf32> -> vector<8x8xf32>
    %cst_114 = arith.constant dense<0.000000e+00> : vector<8x8xf32>
    %142 = tpu.matmul %135, %138, %cst_114 {dimension_numbers = #tpu.dot_dimension_numbers<[1], [1], [0], [0], [0, 0, 1, 0], [], []>} : vector<8x8xf32>, vector<8x8xf32>, vector<8x8xf32> -> vector<8x8xf32>
    %cst_115 = arith.constant 0.353553385 : f32
    %143 = vector.broadcast %cst_115 : f32 to vector<8x8xf32>
    %144 = arith.mulf %142, %143 : vector<8x8xf32>
    %145 = vector.broadcast %129 : vector<1x8xf32> to vector<8x8xf32>
    %146 = arith.addf %144, %145 : vector<8x8xf32>
    %cst_116 = arith.constant dense<0xFF800000> : vector<8xf32>
    %147 = vector.multi_reduction <maximumf>, %146, %cst_116 [1] : vector<8x8xf32> to vector<8xf32>
    %148 = vector.shape_cast %147 : vector<8xf32> to vector<8x1xf32>
    %149 = vector.broadcast %148 : vector<8x1xf32> to vector<8x8xf32>
    %150 = arith.subf %146, %149 : vector<8x8xf32>
    %151 = math.exp %150 : vector<8x8xf32>
    %cst_117 = arith.constant dense<0.000000e+00> : vector<8xf32>
    %152 = vector.multi_reduction <add>, %151, %cst_117 [1] : vector<8x8xf32> to vector<8xf32>
    %153 = vector.shape_cast %152 : vector<8xf32> to vector<8x1xf32>
    %154 = tpu.reciprocal %153 {approx = true} : vector<8x1xf32> -> vector<8x1xf32>
    %155 = vector.broadcast %154 : vector<8x1xf32> to vector<8x8xf32>
    %156 = arith.mulf %151, %155 : vector<8x8xf32>
    %cst_118 = arith.constant dense<0.000000e+00> : vector<8x8xf32>
    %157 = tpu.matmul %156, %141, %cst_118 {dimension_numbers = #tpu.dot_dimension_numbers<[1], [0], [0], [1], [0, 0, 1, 1], [], []>} : vector<8x8xf32>, vector<8x8xf32>, vector<8x8xf32> -> vector<8x8xf32>
    %c0_119 = arith.constant 0 : index
    %c0_120 = arith.constant 0 : index
    %c0_121 = arith.constant 0 : index
    %158 = vector.load %arg7[%c0_119, %c0_120, %c0_121] : memref<4x8x128xf32, #tpu.memory_space<vmem>>, vector<1x8x128xf32>
    %159 = vector.shape_cast %158 : vector<1x8x128xf32> to vector<8x128xf32>
    %cst_122 = arith.constant dense<0.000000e+00> : vector<8x128xf32>
    %160 = tpu.matmul %157, %159, %cst_122 {dimension_numbers = #tpu.dot_dimension_numbers<[1], [0], [0], [1], [0, 0, 1, 1], [], []>} : vector<8x8xf32>, vector<8x128xf32>, vector<8x128xf32> -> vector<8x128xf32>
    %161 = arith.addf %132, %160 : vector<8x128xf32>
    %c1_123 = arith.constant 1 : index
    %c0_124 = arith.constant 0 : index
    %c0_125 = arith.constant 0 : index
    %162 = vector.load %arg4[%c1_123, %c0_124, %c0_125] : memref<4x32x8xf32, #tpu.memory_space<vmem>>, vector<1x32x8xf32>
    %163 = vector.shape_cast %162 : vector<1x32x8xf32> to vector<32x8xf32>
    %cst_126 = arith.constant dense<0.000000e+00> : vector<8x8xf32>
    %164 = tpu.matmul %125, %163, %cst_126 {dimension_numbers = #tpu.dot_dimension_numbers<[1], [0], [0], [1], [0, 0, 1, 1], [], []>} : vector<8x32xf32>, vector<32x8xf32>, vector<8x8xf32> -> vector<8x8xf32>
    %c1_127 = arith.constant 1 : index
    %c0_128 = arith.constant 0 : index
    %c0_129 = arith.constant 0 : index
    %165 = vector.load %arg5[%c1_127, %c0_128, %c0_129] : memref<4x32x8xf32, #tpu.memory_space<vmem>>, vector<1x32x8xf32>
    %166 = vector.shape_cast %165 : vector<1x32x8xf32> to vector<32x8xf32>
    %cst_130 = arith.constant dense<0.000000e+00> : vector<8x8xf32>
    %167 = tpu.matmul %126, %166, %cst_130 {dimension_numbers = #tpu.dot_dimension_numbers<[1], [0], [0], [1], [0, 0, 1, 1], [], []>} : vector<8x32xf32>, vector<32x8xf32>, vector<8x8xf32> -> vector<8x8xf32>
    %c1_131 = arith.constant 1 : index
    %c0_132 = arith.constant 0 : index
    %c0_133 = arith.constant 0 : index
    %168 = vector.load %arg6[%c1_131, %c0_132, %c0_133] : memref<4x32x8xf32, #tpu.memory_space<vmem>>, vector<1x32x8xf32>
    %169 = vector.shape_cast %168 : vector<1x32x8xf32> to vector<32x8xf32>
    %cst_134 = arith.constant dense<0.000000e+00> : vector<8x8xf32>
    %170 = tpu.matmul %127, %169, %cst_134 {dimension_numbers = #tpu.dot_dimension_numbers<[1], [0], [0], [1], [0, 0, 1, 1], [], []>} : vector<8x32xf32>, vector<32x8xf32>, vector<8x8xf32> -> vector<8x8xf32>
    %cst_135 = arith.constant dense<0.000000e+00> : vector<8x8xf32>
    %171 = tpu.matmul %164, %167, %cst_135 {dimension_numbers = #tpu.dot_dimension_numbers<[1], [1], [0], [0], [0, 0, 1, 0], [], []>} : vector<8x8xf32>, vector<8x8xf32>, vector<8x8xf32> -> vector<8x8xf32>
    %cst_136 = arith.constant 0.353553385 : f32
    %172 = vector.broadcast %cst_136 : f32 to vector<8x8xf32>
    %173 = arith.mulf %171, %172 : vector<8x8xf32>
    %174 = vector.broadcast %129 : vector<1x8xf32> to vector<8x8xf32>
    %175 = arith.addf %173, %174 : vector<8x8xf32>
    %cst_137 = arith.constant dense<0xFF800000> : vector<8xf32>
    %176 = vector.multi_reduction <maximumf>, %175, %cst_137 [1] : vector<8x8xf32> to vector<8xf32>
    %177 = vector.shape_cast %176 : vector<8xf32> to vector<8x1xf32>
    %178 = vector.broadcast %177 : vector<8x1xf32> to vector<8x8xf32>
    %179 = arith.subf %175, %178 : vector<8x8xf32>
    %180 = math.exp %179 : vector<8x8xf32>
    %cst_138 = arith.constant dense<0.000000e+00> : vector<8xf32>
    %181 = vector.multi_reduction <add>, %180, %cst_138 [1] : vector<8x8xf32> to vector<8xf32>
    %182 = vector.shape_cast %181 : vector<8xf32> to vector<8x1xf32>
    %183 = tpu.reciprocal %182 {approx = true} : vector<8x1xf32> -> vector<8x1xf32>
    %184 = vector.broadcast %183 : vector<8x1xf32> to vector<8x8xf32>
    %185 = arith.mulf %180, %184 : vector<8x8xf32>
    %cst_139 = arith.constant dense<0.000000e+00> : vector<8x8xf32>
    %186 = tpu.matmul %185, %170, %cst_139 {dimension_numbers = #tpu.dot_dimension_numbers<[1], [0], [0], [1], [0, 0, 1, 1], [], []>} : vector<8x8xf32>, vector<8x8xf32>, vector<8x8xf32> -> vector<8x8xf32>
    %c1_140 = arith.constant 1 : index
    %c0_141 = arith.constant 0 : index
    %c0_142 = arith.constant 0 : index
    %187 = vector.load %arg7[%c1_140, %c0_141, %c0_142] : memref<4x8x128xf32, #tpu.memory_space<vmem>>, vector<1x8x128xf32>
    %188 = vector.shape_cast %187 : vector<1x8x128xf32> to vector<8x128xf32>
    %cst_143 = arith.constant dense<0.000000e+00> : vector<8x128xf32>
    %189 = tpu.matmul %186, %188, %cst_143 {dimension_numbers = #tpu.dot_dimension_numbers<[1], [0], [0], [1], [0, 0, 1, 1], [], []>} : vector<8x8xf32>, vector<8x128xf32>, vector<8x128xf32> -> vector<8x128xf32>
    %190 = arith.addf %161, %189 : vector<8x128xf32>
    %c2_144 = arith.constant 2 : index
    %c0_145 = arith.constant 0 : index
    %c0_146 = arith.constant 0 : index
    %191 = vector.load %arg4[%c2_144, %c0_145, %c0_146] : memref<4x32x8xf32, #tpu.memory_space<vmem>>, vector<1x32x8xf32>
    %192 = vector.shape_cast %191 : vector<1x32x8xf32> to vector<32x8xf32>
    %cst_147 = arith.constant dense<0.000000e+00> : vector<8x8xf32>
    %193 = tpu.matmul %125, %192, %cst_147 {dimension_numbers = #tpu.dot_dimension_numbers<[1], [0], [0], [1], [0, 0, 1, 1], [], []>} : vector<8x32xf32>, vector<32x8xf32>, vector<8x8xf32> -> vector<8x8xf32>
    %c2_148 = arith.constant 2 : index
    %c0_149 = arith.constant 0 : index
    %c0_150 = arith.constant 0 : index
    %194 = vector.load %arg5[%c2_148, %c0_149, %c0_150] : memref<4x32x8xf32, #tpu.memory_space<vmem>>, vector<1x32x8xf32>
    %195 = vector.shape_cast %194 : vector<1x32x8xf32> to vector<32x8xf32>
    %cst_151 = arith.constant dense<0.000000e+00> : vector<8x8xf32>
    %196 = tpu.matmul %126, %195, %cst_151 {dimension_numbers = #tpu.dot_dimension_numbers<[1], [0], [0], [1], [0, 0, 1, 1], [], []>} : vector<8x32xf32>, vector<32x8xf32>, vector<8x8xf32> -> vector<8x8xf32>
    %c2_152 = arith.constant 2 : index
    %c0_153 = arith.constant 0 : index
    %c0_154 = arith.constant 0 : index
    %197 = vector.load %arg6[%c2_152, %c0_153, %c0_154] : memref<4x32x8xf32, #tpu.memory_space<vmem>>, vector<1x32x8xf32>
    %198 = vector.shape_cast %197 : vector<1x32x8xf32> to vector<32x8xf32>
    %cst_155 = arith.constant dense<0.000000e+00> : vector<8x8xf32>
    %199 = tpu.matmul %127, %198, %cst_155 {dimension_numbers = #tpu.dot_dimension_numbers<[1], [0], [0], [1], [0, 0, 1, 1], [], []>} : vector<8x32xf32>, vector<32x8xf32>, vector<8x8xf32> -> vector<8x8xf32>
    %cst_156 = arith.constant dense<0.000000e+00> : vector<8x8xf32>
    %200 = tpu.matmul %193, %196, %cst_156 {dimension_numbers = #tpu.dot_dimension_numbers<[1], [1], [0], [0], [0, 0, 1, 0], [], []>} : vector<8x8xf32>, vector<8x8xf32>, vector<8x8xf32> -> vector<8x8xf32>
    %cst_157 = arith.constant 0.353553385 : f32
    %201 = vector.broadcast %cst_157 : f32 to vector<8x8xf32>
    %202 = arith.mulf %200, %201 : vector<8x8xf32>
    %203 = vector.broadcast %129 : vector<1x8xf32> to vector<8x8xf32>
    %204 = arith.addf %202, %203 : vector<8x8xf32>
    %cst_158 = arith.constant dense<0xFF800000> : vector<8xf32>
    %205 = vector.multi_reduction <maximumf>, %204, %cst_158 [1] : vector<8x8xf32> to vector<8xf32>
    %206 = vector.shape_cast %205 : vector<8xf32> to vector<8x1xf32>
    %207 = vector.broadcast %206 : vector<8x1xf32> to vector<8x8xf32>
    %208 = arith.subf %204, %207 : vector<8x8xf32>
    %209 = math.exp %208 : vector<8x8xf32>
    %cst_159 = arith.constant dense<0.000000e+00> : vector<8xf32>
    %210 = vector.multi_reduction <add>, %209, %cst_159 [1] : vector<8x8xf32> to vector<8xf32>
    %211 = vector.shape_cast %210 : vector<8xf32> to vector<8x1xf32>
    %212 = tpu.reciprocal %211 {approx = true} : vector<8x1xf32> -> vector<8x1xf32>
    %213 = vector.broadcast %212 : vector<8x1xf32> to vector<8x8xf32>
    %214 = arith.mulf %209, %213 : vector<8x8xf32>
    %cst_160 = arith.constant dense<0.000000e+00> : vector<8x8xf32>
    %215 = tpu.matmul %214, %199, %cst_160 {dimension_numbers = #tpu.dot_dimension_numbers<[1], [0], [0], [1], [0, 0, 1, 1], [], []>} : vector<8x8xf32>, vector<8x8xf32>, vector<8x8xf32> -> vector<8x8xf32>
    %c2_161 = arith.constant 2 : index
    %c0_162 = arith.constant 0 : index
    %c0_163 = arith.constant 0 : index
    %216 = vector.load %arg7[%c2_161, %c0_162, %c0_163] : memref<4x8x128xf32, #tpu.memory_space<vmem>>, vector<1x8x128xf32>
    %217 = vector.shape_cast %216 : vector<1x8x128xf32> to vector<8x128xf32>
    %cst_164 = arith.constant dense<0.000000e+00> : vector<8x128xf32>
    %218 = tpu.matmul %215, %217, %cst_164 {dimension_numbers = #tpu.dot_dimension_numbers<[1], [0], [0], [1], [0, 0, 1, 1], [], []>} : vector<8x8xf32>, vector<8x128xf32>, vector<8x128xf32> -> vector<8x128xf32>
    %219 = arith.addf %190, %218 : vector<8x128xf32>
    %c3_165 = arith.constant 3 : index
    %c0_166 = arith.constant 0 : index
    %c0_167 = arith.constant 0 : index
    %220 = vector.load %arg4[%c3_165, %c0_166, %c0_167] : memref<4x32x8xf32, #tpu.memory_space<vmem>>, vector<1x32x8xf32>
    %221 = vector.shape_cast %220 : vector<1x32x8xf32> to vector<32x8xf32>
    %cst_168 = arith.constant dense<0.000000e+00> : vector<8x8xf32>
    %222 = tpu.matmul %125, %221, %cst_168 {dimension_numbers = #tpu.dot_dimension_numbers<[1], [0], [0], [1], [0, 0, 1, 1], [], []>} : vector<8x32xf32>, vector<32x8xf32>, vector<8x8xf32> -> vector<8x8xf32>
    %c3_169 = arith.constant 3 : index
    %c0_170 = arith.constant 0 : index
    %c0_171 = arith.constant 0 : index
    %223 = vector.load %arg5[%c3_169, %c0_170, %c0_171] : memref<4x32x8xf32, #tpu.memory_space<vmem>>, vector<1x32x8xf32>
    %224 = vector.shape_cast %223 : vector<1x32x8xf32> to vector<32x8xf32>
    %cst_172 = arith.constant dense<0.000000e+00> : vector<8x8xf32>
    %225 = tpu.matmul %126, %224, %cst_172 {dimension_numbers = #tpu.dot_dimension_numbers<[1], [0], [0], [1], [0, 0, 1, 1], [], []>} : vector<8x32xf32>, vector<32x8xf32>, vector<8x8xf32> -> vector<8x8xf32>
    %c3_173 = arith.constant 3 : index
    %c0_174 = arith.constant 0 : index
    %c0_175 = arith.constant 0 : index
    %226 = vector.load %arg6[%c3_173, %c0_174, %c0_175] : memref<4x32x8xf32, #tpu.memory_space<vmem>>, vector<1x32x8xf32>
    %227 = vector.shape_cast %226 : vector<1x32x8xf32> to vector<32x8xf32>
    %cst_176 = arith.constant dense<0.000000e+00> : vector<8x8xf32>
    %228 = tpu.matmul %127, %227, %cst_176 {dimension_numbers = #tpu.dot_dimension_numbers<[1], [0], [0], [1], [0, 0, 1, 1], [], []>} : vector<8x32xf32>, vector<32x8xf32>, vector<8x8xf32> -> vector<8x8xf32>
    %cst_177 = arith.constant dense<0.000000e+00> : vector<8x8xf32>
    %229 = tpu.matmul %222, %225, %cst_177 {dimension_numbers = #tpu.dot_dimension_numbers<[1], [1], [0], [0], [0, 0, 1, 0], [], []>} : vector<8x8xf32>, vector<8x8xf32>, vector<8x8xf32> -> vector<8x8xf32>
    %cst_178 = arith.constant 0.353553385 : f32
    %230 = vector.broadcast %cst_178 : f32 to vector<8x8xf32>
    %231 = arith.mulf %229, %230 : vector<8x8xf32>
    %232 = vector.broadcast %129 : vector<1x8xf32> to vector<8x8xf32>
    %233 = arith.addf %231, %232 : vector<8x8xf32>
    %cst_179 = arith.constant dense<0xFF800000> : vector<8xf32>
    %234 = vector.multi_reduction <maximumf>, %233, %cst_179 [1] : vector<8x8xf32> to vector<8xf32>
    %235 = vector.shape_cast %234 : vector<8xf32> to vector<8x1xf32>
    %236 = vector.broadcast %235 : vector<8x1xf32> to vector<8x8xf32>
    %237 = arith.subf %233, %236 : vector<8x8xf32>
    %238 = math.exp %237 : vector<8x8xf32>
    %cst_180 = arith.constant dense<0.000000e+00> : vector<8xf32>
    %239 = vector.multi_reduction <add>, %238, %cst_180 [1] : vector<8x8xf32> to vector<8xf32>
    %240 = vector.shape_cast %239 : vector<8xf32> to vector<8x1xf32>
    %241 = tpu.reciprocal %240 {approx = true} : vector<8x1xf32> -> vector<8x1xf32>
    %242 = vector.broadcast %241 : vector<8x1xf32> to vector<8x8xf32>
    %243 = arith.mulf %238, %242 : vector<8x8xf32>
    %cst_181 = arith.constant dense<0.000000e+00> : vector<8x8xf32>
    %244 = tpu.matmul %243, %228, %cst_181 {dimension_numbers = #tpu.dot_dimension_numbers<[1], [0], [0], [1], [0, 0, 1, 1], [], []>} : vector<8x8xf32>, vector<8x8xf32>, vector<8x8xf32> -> vector<8x8xf32>
    %c3_182 = arith.constant 3 : index
    %c0_183 = arith.constant 0 : index
    %c0_184 = arith.constant 0 : index
    %245 = vector.load %arg7[%c3_182, %c0_183, %c0_184] : memref<4x8x128xf32, #tpu.memory_space<vmem>>, vector<1x8x128xf32>
    %246 = vector.shape_cast %245 : vector<1x8x128xf32> to vector<8x128xf32>
    %cst_185 = arith.constant dense<0.000000e+00> : vector<8x128xf32>
    %247 = tpu.matmul %244, %246, %cst_185 {dimension_numbers = #tpu.dot_dimension_numbers<[1], [0], [0], [1], [0, 0, 1, 1], [], []>} : vector<8x8xf32>, vector<8x128xf32>, vector<8x128xf32> -> vector<8x128xf32>
    %248 = arith.addf %219, %247 : vector<8x128xf32>
    %c8_186 = arith.constant 8 : index
    %c0_187 = arith.constant 0 : index
    %249 = vector.load %arg9[%c8_186, %c0_187] : memref<16x128xf32, #tpu.memory_space<vmem>>, vector<8x128xf32>
    tpu.vector_store %arg9[%c8_186, %c0_187], %248 {strides = array<i32>} : memref<16x128xf32, #tpu.memory_space<vmem>>, vector<8x128xf32>,
    return
  }
}

</mosaic_0001>

<llo_original>
// kernel: mha_forward.1
$region0: #{mha_forward.1}
  #allocation0 [shape = 'u32[]', space=smem, size = 0x4, offset = 0x4, fixed_abs, tag = 'smem constant byte address 0x4 - core index']
  #allocation1 [shape = 'u32[72,128]{1,0:T(1,128)}', space=vmem, size = 0x9000, scoped, tag = 'internal scratch']
  %s0 = inlined_call_operand.vmem [shape: f32[16,32], index: 0, kind: input, shape index: {}]
  %s1 = inlined_call_operand.vmem [shape: f32[16,32], index: 1, kind: input, shape index: {}]
  %s2 = inlined_call_operand.vmem [shape: f32[16,32], index: 2, kind: input, shape index: {}]
  %s3 = inlined_call_operand.vmem [shape: f32[2,1,8], index: 3, kind: input, shape index: {}]
  %s4 = inlined_call_operand.vmem [shape: f32[4,32,8], index: 4, kind: input, shape index: {}]
  %s5 = inlined_call_operand.vmem [shape: f32[4,32,8], index: 5, kind: input, shape index: {}]
  %s6 = inlined_call_operand.vmem [shape: f32[4,32,8], index: 6, kind: input, shape index: {}]
  %s7 = inlined_call_operand.vmem [shape: f32[4,8,128], index: 7, kind: input, shape index: {}]
  %s8 = inlined_call_operand.vmem [shape: f32[1,128], index: 8, kind: input, shape index: {}]
  %s9 = inlined_call_operand.vmem [shape: f32[16,128], index: 9, kind: output, shape index: {}]
  %s10 = sld [smem:[#allocation0]]
  $region46: #{mha_forward.1} parent=0
    _
  %s12 = ssub.s32 1, %s10
  %s13 = scalar_select 0, %s12, %s10
  // Predicated region
  $region2: #{mha_forward.1} parent=0 // pred_check
    _
  $region3: #{mha_forward.1} parent=0 // pred_check_branch
    %15 = sbr.rel (0) target = $region5
  $region4: #{mha_forward.1} parent=0 // pred_region
    _
  $region5: #{mha_forward.1} parent=0 // pred_fallthru
    _
  // Predicated region
  $region6: #{mha_forward.1} parent=0 // pred_check
    _
  $region7: #{mha_forward.1} parent=0 // pred_check_branch
    %17 = sbr.rel (0) target = $region9
  $region8: #{mha_forward.1} parent=0 // pred_region
    _
  $region9: #{mha_forward.1} parent=0 // pred_fallthru
    _
  // Predicated region
  $region10: #{mha_forward.1} parent=0 // pred_check
    _
  $region11: #{mha_forward.1} parent=0 // pred_check_branch
    %19 = sbr.rel (0) target = $region13
  $region12: #{mha_forward.1} parent=0 // pred_region
    _
  $region13: #{mha_forward.1} parent=0 // pred_fallthru
    _
  // Predicated region
  $region14: #{mha_forward.1} parent=0 // pred_check
    _
  $region15: #{mha_forward.1} parent=0 // pred_check_branch
    %21 = sbr.rel (0) target = $region17
  $region16: #{mha_forward.1} parent=0 // pred_region
    _
  $region17: #{mha_forward.1} parent=0 // pred_fallthru
    _
  // Predicated region
  $region18: #{mha_forward.1} parent=0 // pred_check
    _
  $region19: #{mha_forward.1} parent=0 // pred_check_branch
    %23 = sbr.rel (0) target = $region21
  $region20: #{mha_forward.1} parent=0 // pred_region
    _
  $region21: #{mha_forward.1} parent=0 // pred_fallthru
    _
  // Predicated region
  $region22: #{mha_forward.1} parent=0 // pred_check
    _
  $region23: #{mha_forward.1} parent=0 // pred_check_branch
    %25 = sbr.rel (0) target = $region25
  $region24: #{mha_forward.1} parent=0 // pred_region
    _
  $region25: #{mha_forward.1} parent=0 // pred_fallthru
    _
  // Predicated region
  $region26: #{mha_forward.1} parent=0 // pred_check
    _
  $region27: #{mha_forward.1} parent=0 // pred_check_branch
    %27 = sbr.rel (0) target = $region29
  $region28: #{mha_forward.1} parent=0 // pred_region
    _
  $region29: #{mha_forward.1} parent=0 // pred_fallthru
    _
  // Predicated region
  $region30: #{mha_forward.1} parent=0 // pred_check
    _
  $region31: #{mha_forward.1} parent=0 // pred_check_branch
    %29 = sbr.rel (0) target = $region33
  $region32: #{mha_forward.1} parent=0 // pred_region
    _
  $region33: #{mha_forward.1} parent=0 // pred_fallthru
    _
  // Predicated region
  $region34: #{mha_forward.1} parent=0 // pred_check
    _
  $region35: #{mha_forward.1} parent=0 // pred_check_branch
    %31 = sbr.rel (0) target = $region37
  $region36: #{mha_forward.1} parent=0 // pred_region
    _
  $region37: #{mha_forward.1} parent=0 // pred_fallthru
    _
  %v32 = vld [vmem:[%s0] sm:$0xff]
  %v33 = vld [vmem:[%s1] sm:$0xff]
  %v34 = vld [vmem:[%s2] sm:$0xff]
  %v35 = vld [vmem:[%s3] sm:$0x1]
  %v36 = vld [vmem:[%s8] sm:$0x1]
  %v38 = vperm.slane %v36, 0
  %v40 = vld [vmem:[%s4] sm:$0xff]
  %v41 = vld [vmem:[%s4 + $0x8] sm:$0xff]
  %v42 = vld [vmem:[%s4 + $0x10] sm:$0xff]
  %v43 = vld [vmem:[%s4 + $0x18] sm:$0xff]
  %vm44 = vcmask 261120
  %v46 = vsel %vm44, %v32, 0
  %48 = vmatpush.msra.mxu0 0.0
  %49 = vmatpush.msra.mxu0 0.0
  %50 = vmatpush.msra.mxu0 0.0
  %51 = vmatpush.msra.mxu0 0.0
  %52 = vmatpush.msra.mxu0 0.0
  %53 = vmatpush.msra.mxu0 0.0
  %54 = vmatpush.msra.mxu0 0.0
  %55 = vmatpush.msra.mxu0 0.0
  %56 = vmatpush.msra.mxu0 0.0
  %57 = vmatpush.msra.mxu0 0.0
  %58 = vmatpush.msra.mxu0 0.0
  %59 = vmatpush.msra.mxu0 0.0
  %60 = vmatpush.msra.mxu0 %v43
  %61 = vmatpush.msra.mxu0 %v42
  %62 = vmatpush.msra.mxu0 %v41
  %63 = vmatpush.msra.mxu0 %v40
  %64 = vmatmul.f32.gmra.mxu0 %v46
  %v65 = vpop.f32.mrf.mxu0
  %v66 = vadd.f32 0.0, %v65
  %67 = vdwg.mxu0
  %v68 = vld [vmem:[%s5] sm:$0xff]
  %v69 = vld [vmem:[%s5 + $0x8] sm:$0xff]
  %v70 = vld [vmem:[%s5 + $0x10] sm:$0xff]
  %v71 = vld [vmem:[%s5 + $0x18] sm:$0xff]
  %v73 = vsel %vm44, %v33, 0
  %75 = vmatpush.msra.mxu0 0.0
  %76 = vmatpush.msra.mxu0 0.0
  %77 = vmatpush.msra.mxu0 0.0
  %78 = vmatpush.msra.mxu0 0.0
  %79 = vmatpush.msra.mxu0 0.0
  %80 = vmatpush.msra.mxu0 0.0
  %81 = vmatpush.msra.mxu0 0.0
  %82 = vmatpush.msra.mxu0 0.0
  %83 = vmatpush.msra.mxu0 0.0
  %84 = vmatpush.msra.mxu0 0.0
  %85 = vmatpush.msra.mxu0 0.0
  %86 = vmatpush.msra.mxu0 0.0
  %87 = vmatpush.msra.mxu0 %v71
  %88 = vmatpush.msra.mxu0 %v70
  %89 = vmatpush.msra.mxu0 %v69
  %90 = vmatpush.msra.mxu0 %v68
  %91 = vmatmul.f32.gmra.mxu0 %v73
  %v92 = vpop.f32.mrf.mxu0
  %v93 = vadd.f32 0.0, %v92
  %94 = vdwg.mxu0
  %v95 = vld [vmem:[%s6] sm:$0xff]
  %v96 = vld [vmem:[%s6 + $0x8] sm:$0xff]
  %v97 = vld [vmem:[%s6 + $0x10] sm:$0xff]
  %v98 = vld [vmem:[%s6 + $0x18] sm:$0xff]
  %v100 = vsel %vm44, %v34, 0
  %102 = vmatpush.msra.mxu0 0.0
  %103 = vmatpush.msra.mxu0 0.0
  %104 = vmatpush.msra.mxu0 0.0
  %105 = vmatpush.msra.mxu0 0.0
  %106 = vmatpush.msra.mxu0 0.0
  %107 = vmatpush.msra.mxu0 0.0
  %108 = vmatpush.msra.mxu0 0.0
  %109 = vmatpush.msra.mxu0 0.0
  %110 = vmatpush.msra.mxu0 0.0
  %111 = vmatpush.msra.mxu0 0.0
  %112 = vmatpush.msra.mxu0 0.0
  %113 = vmatpush.msra.mxu0 0.0
  %114 = vmatpush.msra.mxu0 %v98
  %115 = vmatpush.msra.mxu0 %v97
  %116 = vmatpush.msra.mxu0 %v96
  %117 = vmatpush.msra.mxu0 %v95
  %118 = vmatmul.f32.gmra.mxu0 %v100
  %v119 = vpop.f32.mrf.mxu0
  %v120 = vadd.f32 0.0, %v119
  %121 = vdwg.mxu0
  %vm122 = vcmask 64512
  %v124 = vsel %vm122, %v66, 0
  %v127 = vsel %vm122, %v93, 0
  %129 = vmatpush.xpose.msra.mxu0 0.0
  %130 = vmatpush.xpose.msra.mxu0 0.0
  %131 = vmatpush.xpose.msra.mxu0 0.0
  %132 = vmatpush.xpose.msra.mxu0 0.0
  %133 = vmatpush.xpose.msra.mxu0 0.0
  %134 = vmatpush.xpose.msra.mxu0 0.0
  %135 = vmatpush.xpose.msra.mxu0 0.0
  %136 = vmatpush.xpose.msra.mxu0 0.0
  %137 = vmatpush.xpose.msra.mxu0 0.0
  %138 = vmatpush.xpose.msra.mxu0 0.0
  %139 = vmatpush.xpose.msra.mxu0 0.0
  %140 = vmatpush.xpose.msra.mxu0 0.0
  %141 = vmatpush.xpose.msra.mxu0 0.0
  %142 = vmatpush.xpose.msra.mxu0 0.0
  %143 = vmatpush.xpose.msra.mxu0 0.0
  %144 = vmatpush.xpose.msra.mxu0 %v127
  %145 = vmatmul.f32.gmra.mxu0 %v124
  %v146 = vpop.f32.mrf.mxu0
  %v147 = vadd.f32 0.0, %v146
  %148 = vdwg.mxu0
  %v149 = vmul.f32 %v147, 0.35355338
  %v151 = vperm.slane %v35, 0
  %v153 = vadd.f32 %v149, %v151
  %v154 = vsel %vm122, %v153, -inf
  %155 = vmax.xlane.f32.xlu0 %v154
  %v156 = vpop.xlane.xlu0 %155
  %v157 = vsub.f32 %v153, %v156
  %v158 = vmul.f32 %v157, 1.442695
  %v159 = vpow.pop %v158
  %v160 = vsel %vm122, %v159, 0.0
  %161 = vadd.xlane.f32.xlu0 %v160
  %v162 = vpop.xlane.xlu0 %161
  %v163 = vrcp.pop %v162
  %v164 = vmul.f32 %v159, %v163
  %v166 = vsel %vm122, %v164, 0
  %168 = vmatpush.msra.mxu0 0.0
  %169 = vmatpush.msra.mxu0 0.0
  %170 = vmatpush.msra.mxu0 0.0
  %171 = vmatpush.msra.mxu0 0.0
  %172 = vmatpush.msra.mxu0 0.0
  %173 = vmatpush.msra.mxu0 0.0
  %174 = vmatpush.msra.mxu0 0.0
  %175 = vmatpush.msra.mxu0 0.0
  %176 = vmatpush.msra.mxu0 0.0
  %177 = vmatpush.msra.mxu0 0.0
  %178 = vmatpush.msra.mxu0 0.0
  %179 = vmatpush.msra.mxu0 0.0
  %180 = vmatpush.msra.mxu0 0.0
  %181 = vmatpush.msra.mxu0 0.0
  %182 = vmatpush.msra.mxu0 0.0
  %183 = vmatpush.msra.mxu0 %v120
  %184 = vmatmul.f32.gmra.mxu0 %v166
  %v185 = vpop.f32.mrf.mxu0
  %v186 = vadd.f32 0.0, %v185
  %187 = vdwg.mxu0
  %v188 = vld [vmem:[%s7] sm:$0xff]
  %v190 = vsel %vm122, %v186, 0
  %192 = vmatpush.msra.mxu0 0.0
  %193 = vmatpush.msra.mxu0 0.0
  %194 = vmatpush.msra.mxu0 0.0
  %195 = vmatpush.msra.mxu0 0.0
  %196 = vmatpush.msra.mxu0 0.0
  %197 = vmatpush.msra.mxu0 0.0
  %198 = vmatpush.msra.mxu0 0.0
  %199 = vmatpush.msra.mxu0 0.0
  %200 = vmatpush.msra.mxu0 0.0
  %201 = vmatpush.msra.mxu0 0.0
  %202 = vmatpush.msra.mxu0 0.0
  %203 = vmatpush.msra.mxu0 0.0
  %204 = vmatpush.msra.mxu0 0.0
  %205 = vmatpush.msra.mxu0 0.0
  %206 = vmatpush.msra.mxu0 0.0
  %207 = vmatpush.msra.mxu0 %v188
  %208 = vmatmul.f32.gmra.mxu0 %v190
  %v209 = vpop.f32.mrf.mxu0
  %v210 = vadd.f32 0.0, %v209
  %211 = vdwg.mxu0
  %v212 = vadd.f32 %v38, %v210
  %s213 = scalar_lea.vmem %s4, 32
  %v214 = vld [vmem:[%s213] sm:$0xff]
  %v215 = vld [vmem:[%s213 + $0x8] sm:$0xff]
  %v216 = vld [vmem:[%s213 + $0x10] sm:$0xff]
  %v217 = vld [vmem:[%s213 + $0x18] sm:$0xff]
  %218 = vmatpush.msra.mxu0 0.0
  %219 = vmatpush.msra.mxu0 0.0
  %220 = vmatpush.msra.mxu0 0.0
  %221 = vmatpush.msra.mxu0 0.0
  %222 = vmatpush.msra.mxu0 0.0
  %223 = vmatpush.msra.mxu0 0.0
  %224 = vmatpush.msra.mxu0 0.0
  %225 = vmatpush.msra.mxu0 0.0
  %226 = vmatpush.msra.mxu0 0.0
  %227 = vmatpush.msra.mxu0 0.0
  %228 = vmatpush.msra.mxu0 0.0
  %229 = vmatpush.msra.mxu0 0.0
  %230 = vmatpush.msra.mxu0 %v217
  %231 = vmatpush.msra.mxu0 %v216
  %232 = vmatpush.msra.mxu0 %v215
  %233 = vmatpush.msra.mxu0 %v214
  %234 = vmatmul.f32.gmra.mxu0 %v46
  %v235 = vpop.f32.mrf.mxu0
  %v236 = vadd.f32 0.0, %v235
  %237 = vdwg.mxu0
  %s238 = scalar_lea.vmem %s5, 32
  %v239 = vld [vmem:[%s238] sm:$0xff]
  %v240 = vld [vmem:[%s238 + $0x8] sm:$0xff]
  %v241 = vld [vmem:[%s238 + $0x10] sm:$0xff]
  %v242 = vld [vmem:[%s238 + $0x18] sm:$0xff]
  %243 = vmatpush.msra.mxu0 0.0
  %244 = vmatpush.msra.mxu0 0.0
  %245 = vmatpush.msra.mxu0 0.0
  %246 = vmatpush.msra.mxu0 0.0
  %247 = vmatpush.msra.mxu0 0.0
  %248 = vmatpush.msra.mxu0 0.0
  %249 = vmatpush.msra.mxu0 0.0
  %250 = vmatpush.msra.mxu0 0.0
  %251 = vmatpush.msra.mxu0 0.0
  %252 = vmatpush.msra.mxu0 0.0
  %253 = vmatpush.msra.mxu0 0.0
  %254 = vmatpush.msra.mxu0 0.0
  %255 = vmatpush.msra.mxu0 %v242
  %256 = vmatpush.msra.mxu0 %v241
  %257 = vmatpush.msra.mxu0 %v240
  %258 = vmatpush.msra.mxu0 %v239
  %259 = vmatmul.f32.gmra.mxu0 %v73
  %v260 = vpop.f32.mrf.mxu0
  %v261 = vadd.f32 0.0, %v260
  %262 = vdwg.mxu0
  %s263 = scalar_lea.vmem %s6, 32
  %v264 = vld [vmem:[%s263] sm:$0xff]
  %v265 = vld [vmem:[%s263 + $0x8] sm:$0xff]
  %v266 = vld [vmem:[%s263 + $0x10] sm:$0xff]
  %v267 = vld [vmem:[%s263 + $0x18] sm:$0xff]
  %268 = vmatpush.msra.mxu0 0.0
  %269 = vmatpush.msra.mxu0 0.0
  %270 = vmatpush.msra.mxu0 0.0
  %271 = vmatpush.msra.mxu0 0.0
  %272 = vmatpush.msra.mxu0 0.0
  %273 = vmatpush.msra.mxu0 0.0
  %274 = vmatpush.msra.mxu0 0.0
  %275 = vmatpush.msra.mxu0 0.0
  %276 = vmatpush.msra.mxu0 0.0
  %277 = vmatpush.msra.mxu0 0.0
  %278 = vmatpush.msra.mxu0 0.0
  %279 = vmatpush.msra.mxu0 0.0
  %280 = vmatpush.msra.mxu0 %v267
  %281 = vmatpush.msra.mxu0 %v266
  %282 = vmatpush.msra.mxu0 %v265
  %283 = vmatpush.msra.mxu0 %v264
  %284 = vmatmul.f32.gmra.mxu0 %v100
  %v285 = vpop.f32.mrf.mxu0
  %v286 = vadd.f32 0.0, %v285
  %287 = vdwg.mxu0
  %v289 = vsel %vm122, %v236, 0
  %v292 = vsel %vm122, %v261, 0
  %294 = vmatpush.xpose.msra.mxu0 0.0
  %295 = vmatpush.xpose.msra.mxu0 0.0
  %296 = vmatpush.xpose.msra.mxu0 0.0
  %297 = vmatpush.xpose.msra.mxu0 0.0
  %298 = vmatpush.xpose.msra.mxu0 0.0
  %299 = vmatpush.xpose.msra.mxu0 0.0
  %300 = vmatpush.xpose.msra.mxu0 0.0
  %301 = vmatpush.xpose.msra.mxu0 0.0
  %302 = vmatpush.xpose.msra.mxu0 0.0
  %303 = vmatpush.xpose.msra.mxu0 0.0
  %304 = vmatpush.xpose.msra.mxu0 0.0
  %305 = vmatpush.xpose.msra.mxu0 0.0
  %306 = vmatpush.xpose.msra.mxu0 0.0
  %307 = vmatpush.xpose.msra.mxu0 0.0
  %308 = vmatpush.xpose.msra.mxu0 0.0
  %309 = vmatpush.xpose.msra.mxu0 %v292
  %310 = vmatmul.f32.gmra.mxu0 %v289
  %v311 = vpop.f32.mrf.mxu0
  %v312 = vadd.f32 0.0, %v311
  %313 = vdwg.mxu0
  %v314 = vmul.f32 %v312, 0.35355338
  %v315 = vadd.f32 %v314, %v151
  %v316 = vsel %vm122, %v315, -inf
  %317 = vmax.xlane.f32.xlu0 %v316
  %v318 = vpop.xlane.xlu0 %317
  %v319 = vsub.f32 %v315, %v318
  %v320 = vmul.f32 %v319, 1.442695
  %v321 = vpow.pop %v320
  %v322 = vsel %vm122, %v321, 0.0
  %323 = vadd.xlane.f32.xlu0 %v322
  %v324 = vpop.xlane.xlu0 %323
  %v325 = vrcp.pop %v324
  %v326 = vmul.f32 %v321, %v325
  %v328 = vsel %vm122, %v326, 0
  %330 = vmatpush.msra.mxu0 0.0
  %331 = vmatpush.msra.mxu0 0.0
  %332 = vmatpush.msra.mxu0 0.0
  %333 = vmatpush.msra.mxu0 0.0
  %334 = vmatpush.msra.mxu0 0.0
  %335 = vmatpush.msra.mxu0 0.0
  %336 = vmatpush.msra.mxu0 0.0
  %337 = vmatpush.msra.mxu0 0.0
  %338 = vmatpush.msra.mxu0 0.0
  %339 = vmatpush.msra.mxu0 0.0
  %340 = vmatpush.msra.mxu0 0.0
  %341 = vmatpush.msra.mxu0 0.0
  %342 = vmatpush.msra.mxu0 0.0
  %343 = vmatpush.msra.mxu0 0.0
  %344 = vmatpush.msra.mxu0 0.0
  %345 = vmatpush.msra.mxu0 %v286
  %346 = vmatmul.f32.gmra.mxu0 %v328
  %v347 = vpop.f32.mrf.mxu0
  %v348 = vadd.f32 0.0, %v347
  %349 = vdwg.mxu0
  %s350 = scalar_lea.vmem %s7, 8
  %v351 = vld [vmem:[%s350] sm:$0xff]
  %v353 = vsel %vm122, %v348, 0
  %355 = vmatpush.msra.mxu0 0.0
  %356 = vmatpush.msra.mxu0 0.0
  %357 = vmatpush.msra.mxu0 0.0
  %358 = vmatpush.msra.mxu0 0.0
  %359 = vmatpush.msra.mxu0 0.0
  %360 = vmatpush.msra.mxu0 0.0
  %361 = vmatpush.msra.mxu0 0.0
  %362 = vmatpush.msra.mxu0 0.0
  %363 = vmatpush.msra.mxu0 0.0
  %364 = vmatpush.msra.mxu0 0.0
  %365 = vmatpush.msra.mxu0 0.0
  %366 = vmatpush.msra.mxu0 0.0
  %367 = vmatpush.msra.mxu0 0.0
  %368 = vmatpush.msra.mxu0 0.0
  %369 = vmatpush.msra.mxu0 0.0
  %370 = vmatpush.msra.mxu0 %v351
  %371 = vmatmul.f32.gmra.mxu0 %v353
  %v372 = vpop.f32.mrf.mxu0
  %v373 = vadd.f32 0.0, %v372
  %374 = vdwg.mxu0
  %v375 = vadd.f32 %v212, %v373
  %s376 = scalar_lea.vmem %s4, 64
  %v377 = vld [vmem:[%s376] sm:$0xff]
  %v378 = vld [vmem:[%s376 + $0x8] sm:$0xff]
  %v379 = vld [vmem:[%s376 + $0x10] sm:$0xff]
  %v380 = vld [vmem:[%s376 + $0x18] sm:$0xff]
  %381 = vmatpush.msra.mxu0 0.0
  %382 = vmatpush.msra.mxu0 0.0
  %383 = vmatpush.msra.mxu0 0.0
  %384 = vmatpush.msra.mxu0 0.0
  %385 = vmatpush.msra.mxu0 0.0
  %386 = vmatpush.msra.mxu0 0.0
  %387 = vmatpush.msra.mxu0 0.0
  %388 = vmatpush.msra.mxu0 0.0
  %389 = vmatpush.msra.mxu0 0.0
  %390 = vmatpush.msra.mxu0 0.0
  %391 = vmatpush.msra.mxu0 0.0
  %392 = vmatpush.msra.mxu0 0.0
  %393 = vmatpush.msra.mxu0 %v380
  %394 = vmatpush.msra.mxu0 %v379
  %395 = vmatpush.msra.mxu0 %v378
  %396 = vmatpush.msra.mxu0 %v377
  %397 = vmatmul.f32.gmra.mxu0 %v46
  %v398 = vpop.f32.mrf.mxu0
  %v399 = vadd.f32 0.0, %v398
  %400 = vdwg.mxu0
  %s401 = scalar_lea.vmem %s5, 64
  %v402 = vld [vmem:[%s401] sm:$0xff]
  %v403 = vld [vmem:[%s401 + $0x8] sm:$0xff]
  %v404 = vld [vmem:[%s401 + $0x10] sm:$0xff]
  %v405 = vld [vmem:[%s401 + $0x18] sm:$0xff]
  %406 = vmatpush.msra.mxu0 0.0
  %407 = vmatpush.msra.mxu0 0.0
  %408 = vmatpush.msra.mxu0 0.0
  %409 = vmatpush.msra.mxu0 0.0
  %410 = vmatpush.msra.mxu0 0.0
  %411 = vmatpush.msra.mxu0 0.0
  %412 = vmatpush.msra.mxu0 0.0
  %413 = vmatpush.msra.mxu0 0.0
  %414 = vmatpush.msra.mxu0 0.0
  %415 = vmatpush.msra.mxu0 0.0
  %416 = vmatpush.msra.mxu0 0.0
  %417 = vmatpush.msra.mxu0 0.0
  %418 = vmatpush.msra.mxu0 %v405
  %419 = vmatpush.msra.mxu0 %v404
  %420 = vmatpush.msra.mxu0 %v403
  %421 = vmatpush.msra.mxu0 %v402
  %422 = vmatmul.f32.gmra.mxu0 %v73
  %v423 = vpop.f32.mrf.mxu0
  %v424 = vadd.f32 0.0, %v423
  %425 = vdwg.mxu0
  %s426 = scalar_lea.vmem %s6, 64
  %v427 = vld [vmem:[%s426] sm:$0xff]
  %v428 = vld [vmem:[%s426 + $0x8] sm:$0xff]
  %v429 = vld [vmem:[%s426 + $0x10] sm:$0xff]
  %v430 = vld [vmem:[%s426 + $0x18] sm:$0xff]
  %431 = vmatpush.msra.mxu0 0.0
  %432 = vmatpush.msra.mxu0 0.0
  %433 = vmatpush.msra.mxu0 0.0
  %434 = vmatpush.msra.mxu0 0.0
  %435 = vmatpush.msra.mxu0 0.0
  %436 = vmatpush.msra.mxu0 0.0
  %437 = vmatpush.msra.mxu0 0.0
  %438 = vmatpush.msra.mxu0 0.0
  %439 = vmatpush.msra.mxu0 0.0
  %440 = vmatpush.msra.mxu0 0.0
  %441 = vmatpush.msra.mxu0 0.0
  %442 = vmatpush.msra.mxu0 0.0
  %443 = vmatpush.msra.mxu0 %v430
  %444 = vmatpush.msra.mxu0 %v429
  %445 = vmatpush.msra.mxu0 %v428
  %446 = vmatpush.msra.mxu0 %v427
  %447 = vmatmul.f32.gmra.mxu0 %v100
  %v448 = vpop.f32.mrf.mxu0
  %v449 = vadd.f32 0.0, %v448
  %450 = vdwg.mxu0
  %v452 = vsel %vm122, %v399, 0
  %v455 = vsel %vm122, %v424, 0
  %457 = vmatpush.xpose.msra.mxu0 0.0
  %458 = vmatpush.xpose.msra.mxu0 0.0
  %459 = vmatpush.xpose.msra.mxu0 0.0
  %460 = vmatpush.xpose.msra.mxu0 0.0
  %461 = vmatpush.xpose.msra.mxu0 0.0
  %462 = vmatpush.xpose.msra.mxu0 0.0
  %463 = vmatpush.xpose.msra.mxu0 0.0
  %464 = vmatpush.xpose.msra.mxu0 0.0
  %465 = vmatpush.xpose.msra.mxu0 0.0
  %466 = vmatpush.xpose.msra.mxu0 0.0
  %467 = vmatpush.xpose.msra.mxu0 0.0
  %468 = vmatpush.xpose.msra.mxu0 0.0
  %469 = vmatpush.xpose.msra.mxu0 0.0
  %470 = vmatpush.xpose.msra.mxu0 0.0
  %471 = vmatpush.xpose.msra.mxu0 0.0
  %472 = vmatpush.xpose.msra.mxu0 %v455
  %473 = vmatmul.f32.gmra.mxu0 %v452
  %v474 = vpop.f32.mrf.mxu0
  %v475 = vadd.f32 0.0, %v474
  %476 = vdwg.mxu0
  %v477 = vmul.f32 %v475, 0.35355338
  %v478 = vadd.f32 %v477, %v151
  %v479 = vsel %vm122, %v478, -inf
  %480 = vmax.xlane.f32.xlu0 %v479
  %v481 = vpop.xlane.xlu0 %480
  %v482 = vsub.f32 %v478, %v481
  %v483 = vmul.f32 %v482, 1.442695
  %v484 = vpow.pop %v483
  %v485 = vsel %vm122, %v484, 0.0
  %486 = vadd.xlane.f32.xlu0 %v485
  %v487 = vpop.xlane.xlu0 %486
  %v488 = vrcp.pop %v487
  %v489 = vmul.f32 %v484, %v488
  %v491 = vsel %vm122, %v489, 0
  %493 = vmatpush.msra.mxu0 0.0
  %494 = vmatpush.msra.mxu0 0.0
  %495 = vmatpush.msra.mxu0 0.0
  %496 = vmatpush.msra.mxu0 0.0
  %497 = vmatpush.msra.mxu0 0.0
  %498 = vmatpush.msra.mxu0 0.0
  %499 = vmatpush.msra.mxu0 0.0
  %500 = vmatpush.msra.mxu0 0.0
  %501 = vmatpush.msra.mxu0 0.0
  %502 = vmatpush.msra.mxu0 0.0
  %503 = vmatpush.msra.mxu0 0.0
  %504 = vmatpush.msra.mxu0 0.0
  %505 = vmatpush.msra.mxu0 0.0
  %506 = vmatpush.msra.mxu0 0.0
  %507 = vmatpush.msra.mxu0 0.0
  %508 = vmatpush.msra.mxu0 %v449
  %509 = vmatmul.f32.gmra.mxu0 %v491
  %v510 = vpop.f32.mrf.mxu0
  %v511 = vadd.f32 0.0, %v510
  %512 = vdwg.mxu0
  %s513 = scalar_lea.vmem %s7, 16
  %v514 = vld [vmem:[%s513] sm:$0xff]
  %v516 = vsel %vm122, %v511, 0
  %518 = vmatpush.msra.mxu0 0.0
  %519 = vmatpush.msra.mxu0 0.0
  %520 = vmatpush.msra.mxu0 0.0
  %521 = vmatpush.msra.mxu0 0.0
  %522 = vmatpush.msra.mxu0 0.0
  %523 = vmatpush.msra.mxu0 0.0
  %524 = vmatpush.msra.mxu0 0.0
  %525 = vmatpush.msra.mxu0 0.0
  %526 = vmatpush.msra.mxu0 0.0
  %527 = vmatpush.msra.mxu0 0.0
  %528 = vmatpush.msra.mxu0 0.0
  %529 = vmatpush.msra.mxu0 0.0
  %530 = vmatpush.msra.mxu0 0.0
  %531 = vmatpush.msra.mxu0 0.0
  %532 = vmatpush.msra.mxu0 0.0
  %533 = vmatpush.msra.mxu0 %v514
  %534 = vmatmul.f32.gmra.mxu0 %v516
  %v535 = vpop.f32.mrf.mxu0
  %v536 = vadd.f32 0.0, %v535
  %537 = vdwg.mxu0
  %v538 = vadd.f32 %v375, %v536
  %s539 = scalar_lea.vmem %s4, 96
  %v540 = vld [vmem:[%s539] sm:$0xff]
  %v541 = vld [vmem:[%s539 + $0x8] sm:$0xff]
  %v542 = vld [vmem:[%s539 + $0x10] sm:$0xff]
  %v543 = vld [vmem:[%s539 + $0x18] sm:$0xff]
  %544 = vmatpush.msra.mxu0 0.0
  %545 = vmatpush.msra.mxu0 0.0
  %546 = vmatpush.msra.mxu0 0.0
  %547 = vmatpush.msra.mxu0 0.0
  %548 = vmatpush.msra.mxu0 0.0
  %549 = vmatpush.msra.mxu0 0.0
  %550 = vmatpush.msra.mxu0 0.0
  %551 = vmatpush.msra.mxu0 0.0
  %552 = vmatpush.msra.mxu0 0.0
  %553 = vmatpush.msra.mxu0 0.0
  %554 = vmatpush.msra.mxu0 0.0
  %555 = vmatpush.msra.mxu0 0.0
  %556 = vmatpush.msra.mxu0 %v543
  %557 = vmatpush.msra.mxu0 %v542
  %558 = vmatpush.msra.mxu0 %v541
  %559 = vmatpush.msra.mxu0 %v540
  %560 = vmatmul.f32.gmra.mxu0 %v46
  %v561 = vpop.f32.mrf.mxu0
  %v562 = vadd.f32 0.0, %v561
  %563 = vdwg.mxu0
  %s564 = scalar_lea.vmem %s5, 96
  %v565 = vld [vmem:[%s564] sm:$0xff]
  %v566 = vld [vmem:[%s564 + $0x8] sm:$0xff]
  %v567 = vld [vmem:[%s564 + $0x10] sm:$0xff]
  %v568 = vld [vmem:[%s564 + $0x18] sm:$0xff]
  %569 = vmatpush.msra.mxu0 0.0
  %570 = vmatpush.msra.mxu0 0.0
  %571 = vmatpush.msra.mxu0 0.0
  %572 = vmatpush.msra.mxu0 0.0
  %573 = vmatpush.msra.mxu0 0.0
  %574 = vmatpush.msra.mxu0 0.0
  %575 = vmatpush.msra.mxu0 0.0
  %576 = vmatpush.msra.mxu0 0.0
  %577 = vmatpush.msra.mxu0 0.0
  %578 = vmatpush.msra.mxu0 0.0
  %579 = vmatpush.msra.mxu0 0.0
  %580 = vmatpush.msra.mxu0 0.0
  %581 = vmatpush.msra.mxu0 %v568
  %582 = vmatpush.msra.mxu0 %v567
  %583 = vmatpush.msra.mxu0 %v566
  %584 = vmatpush.msra.mxu0 %v565
  %585 = vmatmul.f32.gmra.mxu0 %v73
  %v586 = vpop.f32.mrf.mxu0
  %v587 = vadd.f32 0.0, %v586
  %588 = vdwg.mxu0
  %s589 = scalar_lea.vmem %s6, 96
  %v590 = vld [vmem:[%s589] sm:$0xff]
  %v591 = vld [vmem:[%s589 + $0x8] sm:$0xff]
  %v592 = vld [vmem:[%s589 + $0x10] sm:$0xff]
  %v593 = vld [vmem:[%s589 + $0x18] sm:$0xff]
  %594 = vmatpush.msra.mxu0 0.0
  %595 = vmatpush.msra.mxu0 0.0
  %596 = vmatpush.msra.mxu0 0.0
  %597 = vmatpush.msra.mxu0 0.0
  %598 = vmatpush.msra.mxu0 0.0
  %599 = vmatpush.msra.mxu0 0.0
  %600 = vmatpush.msra.mxu0 0.0
  %601 = vmatpush.msra.mxu0 0.0
  %602 = vmatpush.msra.mxu0 0.0
  %603 = vmatpush.msra.mxu0 0.0
  %604 = vmatpush.msra.mxu0 0.0
  %605 = vmatpush.msra.mxu0 0.0
  %606 = vmatpush.msra.mxu0 %v593
  %607 = vmatpush.msra.mxu0 %v592
  %608 = vmatpush.msra.mxu0 %v591
  %609 = vmatpush.msra.mxu0 %v590
  %610 = vmatmul.f32.gmra.mxu0 %v100
  %v611 = vpop.f32.mrf.mxu0
  %v612 = vadd.f32 0.0, %v611
  %613 = vdwg.mxu0
  %v615 = vsel %vm122, %v562, 0
  %v618 = vsel %vm122, %v587, 0
  %620 = vmatpush.xpose.msra.mxu0 0.0
  %621 = vmatpush.xpose.msra.mxu0 0.0
  %622 = vmatpush.xpose.msra.mxu0 0.0
  %623 = vmatpush.xpose.msra.mxu0 0.0
  %624 = vmatpush.xpose.msra.mxu0 0.0
  %625 = vmatpush.xpose.msra.mxu0 0.0
  %626 = vmatpush.xpose.msra.mxu0 0.0
  %627 = vmatpush.xpose.msra.mxu0 0.0
  %628 = vmatpush.xpose.msra.mxu0 0.0
  %629 = vmatpush.xpose.msra.mxu0 0.0
  %630 = vmatpush.xpose.msra.mxu0 0.0
  %631 = vmatpush.xpose.msra.mxu0 0.0
  %632 = vmatpush.xpose.msra.mxu0 0.0
  %633 = vmatpush.xpose.msra.mxu0 0.0
  %634 = vmatpush.xpose.msra.mxu0 0.0
  %635 = vmatpush.xpose.msra.mxu0 %v618
  %636 = vmatmul.f32.gmra.mxu0 %v615
  %v637 = vpop.f32.mrf.mxu0
  %v638 = vadd.f32 0.0, %v637
  %639 = vdwg.mxu0
  %v640 = vmul.f32 %v638, 0.35355338
  %v641 = vadd.f32 %v640, %v151
  %v642 = vsel %vm122, %v641, -inf
  %643 = vmax.xlane.f32.xlu0 %v642
  %v644 = vpop.xlane.xlu0 %643
  %v645 = vsub.f32 %v641, %v644
  %v646 = vmul.f32 %v645, 1.442695
  %v647 = vpow.pop %v646
  %v648 = vsel %vm122, %v647, 0.0
  %649 = vadd.xlane.f32.xlu0 %v648
  %v650 = vpop.xlane.xlu0 %649
  %v651 = vrcp.pop %v650
  %v652 = vmul.f32 %v647, %v651
  %v654 = vsel %vm122, %v652, 0
  %656 = vmatpush.msra.mxu0 0.0
  %657 = vmatpush.msra.mxu0 0.0
  %658 = vmatpush.msra.mxu0 0.0
  %659 = vmatpush.msra.mxu0 0.0
  %660 = vmatpush.msra.mxu0 0.0
  %661 = vmatpush.msra.mxu0 0.0
  %662 = vmatpush.msra.mxu0 0.0
  %663 = vmatpush.msra.mxu0 0.0
  %664 = vmatpush.msra.mxu0 0.0
  %665 = vmatpush.msra.mxu0 0.0
  %666 = vmatpush.msra.mxu0 0.0
  %667 = vmatpush.msra.mxu0 0.0
  %668 = vmatpush.msra.mxu0 0.0
  %669 = vmatpush.msra.mxu0 0.0
  %670 = vmatpush.msra.mxu0 0.0
  %671 = vmatpush.msra.mxu0 %v612
  %672 = vmatmul.f32.gmra.mxu0 %v654
  %v673 = vpop.f32.mrf.mxu0
  %v674 = vadd.f32 0.0, %v673
  %675 = vdwg.mxu0
  %s676 = scalar_lea.vmem %s7, 24
  %v677 = vld [vmem:[%s676] sm:$0xff]
  %v679 = vsel %vm122, %v674, 0
  %681 = vmatpush.msra.mxu0 0.0
  %682 = vmatpush.msra.mxu0 0.0
  %683 = vmatpush.msra.mxu0 0.0
  %684 = vmatpush.msra.mxu0 0.0
  %685 = vmatpush.msra.mxu0 0.0
  %686 = vmatpush.msra.mxu0 0.0
  %687 = vmatpush.msra.mxu0 0.0
  %688 = vmatpush.msra.mxu0 0.0
  %689 = vmatpush.msra.mxu0 0.0
  %690 = vmatpush.msra.mxu0 0.0
  %691 = vmatpush.msra.mxu0 0.0
  %692 = vmatpush.msra.mxu0 0.0
  %693 = vmatpush.msra.mxu0 0.0
  %694 = vmatpush.msra.mxu0 0.0
  %695 = vmatpush.msra.mxu0 0.0
  %696 = vmatpush.msra.mxu0 %v677
  %697 = vmatmul.f32.gmra.mxu0 %v679
  %v698 = vpop.f32.mrf.mxu0
  %v699 = vadd.f32 0.0, %v698
  %700 = vdwg.mxu0
  %v701 = vadd.f32 %v538, %v699
  %702 = vst [vmem:[%s9] sm:$0xff] %v701
  %v703 = vld [vmem:[%s0 + $0x8] sm:$0xff]
  %v704 = vld [vmem:[%s1 + $0x8] sm:$0xff]
  %v705 = vld [vmem:[%s2 + $0x8] sm:$0xff]
  %s706 = scalar_lea.vmem %s3, 1
  %v707 = vld [vmem:[%s706] sm:$0x1]
  %v708 = vld [vmem:[%s8] sm:$0x1]
  %v710 = vperm.slane %v708, 0
  %v712 = vld [vmem:[%s4] sm:$0xff]
  %v713 = vld [vmem:[%s4 + $0x8] sm:$0xff]
  %v714 = vld [vmem:[%s4 + $0x10] sm:$0xff]
  %v715 = vld [vmem:[%s4 + $0x18] sm:$0xff]
  %v717 = vsel %vm44, %v703, 0
  %719 = vmatpush.msra.mxu0 0.0
  %720 = vmatpush.msra.mxu0 0.0
  %721 = vmatpush.msra.mxu0 0.0
  %722 = vmatpush.msra.mxu0 0.0
  %723 = vmatpush.msra.mxu0 0.0
  %724 = vmatpush.msra.mxu0 0.0
  %725 = vmatpush.msra.mxu0 0.0
  %726 = vmatpush.msra.mxu0 0.0
  %727 = vmatpush.msra.mxu0 0.0
  %728 = vmatpush.msra.mxu0 0.0
  %729 = vmatpush.msra.mxu0 0.0
  %730 = vmatpush.msra.mxu0 0.0
  %731 = vmatpush.msra.mxu0 %v715
  %732 = vmatpush.msra.mxu0 %v714
  %733 = vmatpush.msra.mxu0 %v713
  %734 = vmatpush.msra.mxu0 %v712
  %735 = vmatmul.f32.gmra.mxu0 %v717
  %v736 = vpop.f32.mrf.mxu0
  %v737 = vadd.f32 0.0, %v736
  %738 = vdwg.mxu0
  %v739 = vld [vmem:[%s5] sm:$0xff]
  %v740 = vld [vmem:[%s5 + $0x8] sm:$0xff]
  %v741 = vld [vmem:[%s5 + $0x10] sm:$0xff]
  %v742 = vld [vmem:[%s5 + $0x18] sm:$0xff]
  %v744 = vsel %vm44, %v704, 0
  %746 = vmatpush.msra.mxu0 0.0
  %747 = vmatpush.msra.mxu0 0.0
  %748 = vmatpush.msra.mxu0 0.0
  %749 = vmatpush.msra.mxu0 0.0
  %750 = vmatpush.msra.mxu0 0.0
  %751 = vmatpush.msra.mxu0 0.0
  %752 = vmatpush.msra.mxu0 0.0
  %753 = vmatpush.msra.mxu0 0.0
  %754 = vmatpush.msra.mxu0 0.0
  %755 = vmatpush.msra.mxu0 0.0
  %756 = vmatpush.msra.mxu0 0.0
  %757 = vmatpush.msra.mxu0 0.0
  %758 = vmatpush.msra.mxu0 %v742
  %759 = vmatpush.msra.mxu0 %v741
  %760 = vmatpush.msra.mxu0 %v740
  %761 = vmatpush.msra.mxu0 %v739
  %762 = vmatmul.f32.gmra.mxu0 %v744
  %v763 = vpop.f32.mrf.mxu0
  %v764 = vadd.f32 0.0, %v763
  %765 = vdwg.mxu0
  %v766 = vld [vmem:[%s6] sm:$0xff]
  %v767 = vld [vmem:[%s6 + $0x8] sm:$0xff]
  %v768 = vld [vmem:[%s6 + $0x10] sm:$0xff]
  %v769 = vld [vmem:[%s6 + $0x18] sm:$0xff]
  %v771 = vsel %vm44, %v705, 0
  %773 = vmatpush.msra.mxu0 0.0
  %774 = vmatpush.msra.mxu0 0.0
  %775 = vmatpush.msra.mxu0 0.0
  %776 = vmatpush.msra.mxu0 0.0
  %777 = vmatpush.msra.mxu0 0.0
  %778 = vmatpush.msra.mxu0 0.0
  %779 = vmatpush.msra.mxu0 0.0
  %780 = vmatpush.msra.mxu0 0.0
  %781 = vmatpush.msra.mxu0 0.0
  %782 = vmatpush.msra.mxu0 0.0
  %783 = vmatpush.msra.mxu0 0.0
  %784 = vmatpush.msra.mxu0 0.0
  %785 = vmatpush.msra.mxu0 %v769
  %786 = vmatpush.msra.mxu0 %v768
  %787 = vmatpush.msra.mxu0 %v767
  %788 = vmatpush.msra.mxu0 %v766
  %789 = vmatmul.f32.gmra.mxu0 %v771
  %v790 = vpop.f32.mrf.mxu0
  %v791 = vadd.f32 0.0, %v790
  %792 = vdwg.mxu0
  %v794 = vsel %vm122, %v737, 0
  %v797 = vsel %vm122, %v764, 0
  %799 = vmatpush.xpose.msra.mxu0 0.0
  %800 = vmatpush.xpose.msra.mxu0 0.0
  %801 = vmatpush.xpose.msra.mxu0 0.0
  %802 = vmatpush.xpose.msra.mxu0 0.0
  %803 = vmatpush.xpose.msra.mxu0 0.0
  %804 = vmatpush.xpose.msra.mxu0 0.0
  %805 = vmatpush.xpose.msra.mxu0 0.0
  %806 = vmatpush.xpose.msra.mxu0 0.0
  %807 = vmatpush.xpose.msra.mxu0 0.0
  %808 = vmatpush.xpose.msra.mxu0 0.0
  %809 = vmatpush.xpose.msra.mxu0 0.0
  %810 = vmatpush.xpose.msra.mxu0 0.0
  %811 = vmatpush.xpose.msra.mxu0 0.0
  %812 = vmatpush.xpose.msra.mxu0 0.0
  %813 = vmatpush.xpose.msra.mxu0 0.0
  %814 = vmatpush.xpose.msra.mxu0 %v797
  %815 = vmatmul.f32.gmra.mxu0 %v794
  %v816 = vpop.f32.mrf.mxu0
  %v817 = vadd.f32 0.0, %v816
  %818 = vdwg.mxu0
  %v819 = vmul.f32 %v817, 0.35355338
  %v821 = vperm.slane %v707, 0
  %v823 = vadd.f32 %v819, %v821
  %v824 = vsel %vm122, %v823, -inf
  %825 = vmax.xlane.f32.xlu0 %v824
  %v826 = vpop.xlane.xlu0 %825
  %v827 = vsub.f32 %v823, %v826
  %v828 = vmul.f32 %v827, 1.442695
  %v829 = vpow.pop %v828
  %v830 = vsel %vm122, %v829, 0.0
  %831 = vadd.xlane.f32.xlu0 %v830
  %v832 = vpop.xlane.xlu0 %831
  %v833 = vrcp.pop %v832
  %v834 = vmul.f32 %v829, %v833
  %v836 = vsel %vm122, %v834, 0
  %838 = vmatpush.msra.mxu0 0.0
  %839 = vmatpush.msra.mxu0 0.0
  %840 = vmatpush.msra.mxu0 0.0
  %841 = vmatpush.msra.mxu0 0.0
  %842 = vmatpush.msra.mxu0 0.0
  %843 = vmatpush.msra.mxu0 0.0
  %844 = vmatpush.msra.mxu0 0.0
  %845 = vmatpush.msra.mxu0 0.0
  %846 = vmatpush.msra.mxu0 0.0
  %847 = vmatpush.msra.mxu0 0.0
  %848 = vmatpush.msra.mxu0 0.0
  %849 = vmatpush.msra.mxu0 0.0
  %850 = vmatpush.msra.mxu0 0.0
  %851 = vmatpush.msra.mxu0 0.0
  %852 = vmatpush.msra.mxu0 0.0
  %853 = vmatpush.msra.mxu0 %v791
  %854 = vmatmul.f32.gmra.mxu0 %v836
  %v855 = vpop.f32.mrf.mxu0
  %v856 = vadd.f32 0.0, %v855
  %857 = vdwg.mxu0
  %v858 = vld [vmem:[%s7] sm:$0xff]
  %v860 = vsel %vm122, %v856, 0
  %862 = vmatpush.msra.mxu0 0.0
  %863 = vmatpush.msra.mxu0 0.0
  %864 = vmatpush.msra.mxu0 0.0
  %865 = vmatpush.msra.mxu0 0.0
  %866 = vmatpush.msra.mxu0 0.0
  %867 = vmatpush.msra.mxu0 0.0
  %868 = vmatpush.msra.mxu0 0.0
  %869 = vmatpush.msra.mxu0 0.0
  %870 = vmatpush.msra.mxu0 0.0
  %871 = vmatpush.msra.mxu0 0.0
  %872 = vmatpush.msra.mxu0 0.0
  %873 = vmatpush.msra.mxu0 0.0
  %874 = vmatpush.msra.mxu0 0.0
  %875 = vmatpush.msra.mxu0 0.0
  %876 = vmatpush.msra.mxu0 0.0
  %877 = vmatpush.msra.mxu0 %v858
  %878 = vmatmul.f32.gmra.mxu0 %v860
  %v879 = vpop.f32.mrf.mxu0
  %v880 = vadd.f32 0.0, %v879
  %881 = vdwg.mxu0
  %v882 = vadd.f32 %v710, %v880
  %v883 = vld [vmem:[%s213] sm:$0xff]
  %v884 = vld [vmem:[%s213 + $0x8] sm:$0xff]
  %v885 = vld [vmem:[%s213 + $0x10] sm:$0xff]
  %v886 = vld [vmem:[%s213 + $0x18] sm:$0xff]
  %887 = vmatpush.msra.mxu0 0.0
  %888 = vmatpush.msra.mxu0 0.0
  %889 = vmatpush.msra.mxu0 0.0
  %890 = vmatpush.msra.mxu0 0.0
  %891 = vmatpush.msra.mxu0 0.0
  %892 = vmatpush.msra.mxu0 0.0
  %893 = vmatpush.msra.mxu0 0.0
  %894 = vmatpush.msra.mxu0 0.0
  %895 = vmatpush.msra.mxu0 0.0
  %896 = vmatpush.msra.mxu0 0.0
  %897 = vmatpush.msra.mxu0 0.0
  %898 = vmatpush.msra.mxu0 0.0
  %899 = vmatpush.msra.mxu0 %v886
  %900 = vmatpush.msra.mxu0 %v885
  %901 = vmatpush.msra.mxu0 %v884
  %902 = vmatpush.msra.mxu0 %v883
  %903 = vmatmul.f32.gmra.mxu0 %v717
  %v904 = vpop.f32.mrf.mxu0
  %v905 = vadd.f32 0.0, %v904
  %906 = vdwg.mxu0
  %v907 = vld [vmem:[%s238] sm:$0xff]
  %v908 = vld [vmem:[%s238 + $0x8] sm:$0xff]
  %v909 = vld [vmem:[%s238 + $0x10] sm:$0xff]
  %v910 = vld [vmem:[%s238 + $0x18] sm:$0xff]
  %911 = vmatpush.msra.mxu0 0.0
  %912 = vmatpush.msra.mxu0 0.0
  %913 = vmatpush.msra.mxu0 0.0
  %914 = vmatpush.msra.mxu0 0.0
  %915 = vmatpush.msra.mxu0 0.0
  %916 = vmatpush.msra.mxu0 0.0
  %917 = vmatpush.msra.mxu0 0.0
  %918 = vmatpush.msra.mxu0 0.0
  %919 = vmatpush.msra.mxu0 0.0
  %920 = vmatpush.msra.mxu0 0.0
  %921 = vmatpush.msra.mxu0 0.0
  %922 = vmatpush.msra.mxu0 0.0
  %923 = vmatpush.msra.mxu0 %v910
  %924 = vmatpush.msra.mxu0 %v909
  %925 = vmatpush.msra.mxu0 %v908
  %926 = vmatpush.msra.mxu0 %v907
  %927 = vmatmul.f32.gmra.mxu0 %v744
  %v928 = vpop.f32.mrf.mxu0
  %v929 = vadd.f32 0.0, %v928
  %930 = vdwg.mxu0
  %v931 = vld [vmem:[%s263] sm:$0xff]
  %v932 = vld [vmem:[%s263 + $0x8] sm:$0xff]
  %v933 = vld [vmem:[%s263 + $0x10] sm:$0xff]
  %v934 = vld [vmem:[%s263 + $0x18] sm:$0xff]
  %935 = vmatpush.msra.mxu0 0.0
  %936 = vmatpush.msra.mxu0 0.0
  %937 = vmatpush.msra.mxu0 0.0
  %938 = vmatpush.msra.mxu0 0.0
  %939 = vmatpush.msra.mxu0 0.0
  %940 = vmatpush.msra.mxu0 0.0
  %941 = vmatpush.msra.mxu0 0.0
  %942 = vmatpush.msra.mxu0 0.0
  %943 = vmatpush.msra.mxu0 0.0
  %944 = vmatpush.msra.mxu0 0.0
  %945 = vmatpush.msra.mxu0 0.0
  %946 = vmatpush.msra.mxu0 0.0
  %947 = vmatpush.msra.mxu0 %v934
  %948 = vmatpush.msra.mxu0 %v933
  %949 = vmatpush.msra.mxu0 %v932
  %950 = vmatpush.msra.mxu0 %v931
  %951 = vmatmul.f32.gmra.mxu0 %v771
  %v952 = vpop.f32.mrf.mxu0
  %v953 = vadd.f32 0.0, %v952
  %954 = vdwg.mxu0
  %v956 = vsel %vm122, %v905, 0
  %v959 = vsel %vm122, %v929, 0
  %961 = vmatpush.xpose.msra.mxu0 0.0
  %962 = vmatpush.xpose.msra.mxu0 0.0
  %963 = vmatpush.xpose.msra.mxu0 0.0
  %964 = vmatpush.xpose.msra.mxu0 0.0
  %965 = vmatpush.xpose.msra.mxu0 0.0
  %966 = vmatpush.xpose.msra.mxu0 0.0
  %967 = vmatpush.xpose.msra.mxu0 0.0
  %968 = vmatpush.xpose.msra.mxu0 0.0
  %969 = vmatpush.xpose.msra.mxu0 0.0
  %970 = vmatpush.xpose.msra.mxu0 0.0
  %971 = vmatpush.xpose.msra.mxu0 0.0
  %972 = vmatpush.xpose.msra.mxu0 0.0
  %973 = vmatpush.xpose.msra.mxu0 0.0
  %974 = vmatpush.xpose.msra.mxu0 0.0
  %975 = vmatpush.xpose.msra.mxu0 0.0
  %976 = vmatpush.xpose.msra.mxu0 %v959
  %977 = vmatmul.f32.gmra.mxu0 %v956
  %v978 = vpop.f32.mrf.mxu0
  %v979 = vadd.f32 0.0, %v978
  %980 = vdwg.mxu0
  %v981 = vmul.f32 %v979, 0.35355338
  %v982 = vadd.f32 %v981, %v821
  %v983 = vsel %vm122, %v982, -inf
  %984 = vmax.xlane.f32.xlu0 %v983
  %v985 = vpop.xlane.xlu0 %984
  %v986 = vsub.f32 %v982, %v985
  %v987 = vmul.f32 %v986, 1.442695
  %v988 = vpow.pop %v987
  %v989 = vsel %vm122, %v988, 0.0
  %990 = vadd.xlane.f32.xlu0 %v989
  %v991 = vpop.xlane.xlu0 %990
  %v992 = vrcp.pop %v991
  %v993 = vmul.f32 %v988, %v992
  %v995 = vsel %vm122, %v993, 0
  %997 = vmatpush.msra.mxu0 0.0
  %998 = vmatpush.msra.mxu0 0.0
  %999 = vmatpush.msra.mxu0 0.0
  %1000 = vmatpush.msra.mxu0 0.0
  %1001 = vmatpush.msra.mxu0 0.0
  %1002 = vmatpush.msra.mxu0 0.0
  %1003 = vmatpush.msra.mxu0 0.0
  %1004 = vmatpush.msra.mxu0 0.0
  %1005 = vmatpush.msra.mxu0 0.0
  %1006 = vmatpush.msra.mxu0 0.0
  %1007 = vmatpush.msra.mxu0 0.0
  %1008 = vmatpush.msra.mxu0 0.0
  %1009 = vmatpush.msra.mxu0 0.0
  %1010 = vmatpush.msra.mxu0 0.0
  %1011 = vmatpush.msra.mxu0 0.0
  %1012 = vmatpush.msra.mxu0 %v953
  %1013 = vmatmul.f32.gmra.mxu0 %v995
  %v1014 = vpop.f32.mrf.mxu0
  %v1015 = vadd.f32 0.0, %v1014
  %1016 = vdwg.mxu0
  %v1017 = vld [vmem:[%s350] sm:$0xff]
  %v1019 = vsel %vm122, %v1015, 0
  %1021 = vmatpush.msra.mxu0 0.0
  %1022 = vmatpush.msra.mxu0 0.0
  %1023 = vmatpush.msra.mxu0 0.0
  %1024 = vmatpush.msra.mxu0 0.0
  %1025 = vmatpush.msra.mxu0 0.0
  %1026 = vmatpush.msra.mxu0 0.0
  %1027 = vmatpush.msra.mxu0 0.0
  %1028 = vmatpush.msra.mxu0 0.0
  %1029 = vmatpush.msra.mxu0 0.0
  %1030 = vmatpush.msra.mxu0 0.0
  %1031 = vmatpush.msra.mxu0 0.0
  %1032 = vmatpush.msra.mxu0 0.0
  %1033 = vmatpush.msra.mxu0 0.0
  %1034 = vmatpush.msra.mxu0 0.0
  %1035 = vmatpush.msra.mxu0 0.0
  %1036 = vmatpush.msra.mxu0 %v1017
  %1037 = vmatmul.f32.gmra.mxu0 %v1019
  %v1038 = vpop.f32.mrf.mxu0
  %v1039 = vadd.f32 0.0, %v1038
  %1040 = vdwg.mxu0
  %v1041 = vadd.f32 %v882, %v1039
  %v1042 = vld [vmem:[%s376] sm:$0xff]
  %v1043 = vld [vmem:[%s376 + $0x8] sm:$0xff]
  %v1044 = vld [vmem:[%s376 + $0x10] sm:$0xff]
  %v1045 = vld [vmem:[%s376 + $0x18] sm:$0xff]
  %1046 = vmatpush.msra.mxu0 0.0
  %1047 = vmatpush.msra.mxu0 0.0
  %1048 = vmatpush.msra.mxu0 0.0
  %1049 = vmatpush.msra.mxu0 0.0
  %1050 = vmatpush.msra.mxu0 0.0
  %1051 = vmatpush.msra.mxu0 0.0
  %1052 = vmatpush.msra.mxu0 0.0
  %1053 = vmatpush.msra.mxu0 0.0
  %1054 = vmatpush.msra.mxu0 0.0
  %1055 = vmatpush.msra.mxu0 0.0
  %1056 = vmatpush.msra.mxu0 0.0
  %1057 = vmatpush.msra.mxu0 0.0
  %1058 = vmatpush.msra.mxu0 %v1045
  %1059 = vmatpush.msra.mxu0 %v1044
  %1060 = vmatpush.msra.mxu0 %v1043
  %1061 = vmatpush.msra.mxu0 %v1042
  %1062 = vmatmul.f32.gmra.mxu0 %v717
  %v1063 = vpop.f32.mrf.mxu0
  %v1064 = vadd.f32 0.0, %v1063
  %1065 = vdwg.mxu0
  %v1066 = vld [vmem:[%s401] sm:$0xff]
  %v1067 = vld [vmem:[%s401 + $0x8] sm:$0xff]
  %v1068 = vld [vmem:[%s401 + $0x10] sm:$0xff]
  %v1069 = vld [vmem:[%s401 + $0x18] sm:$0xff]
  %1070 = vmatpush.msra.mxu0 0.0
  %1071 = vmatpush.msra.mxu0 0.0
  %1072 = vmatpush.msra.mxu0 0.0
  %1073 = vmatpush.msra.mxu0 0.0
  %1074 = vmatpush.msra.mxu0 0.0
  %1075 = vmatpush.msra.mxu0 0.0
  %1076 = vmatpush.msra.mxu0 0.0
  %1077 = vmatpush.msra.mxu0 0.0
  %1078 = vmatpush.msra.mxu0 0.0
  %1079 = vmatpush.msra.mxu0 0.0
  %1080 = vmatpush.msra.mxu0 0.0
  %1081 = vmatpush.msra.mxu0 0.0
  %1082 = vmatpush.msra.mxu0 %v1069
  %1083 = vmatpush.msra.mxu0 %v1068
  %1084 = vmatpush.msra.mxu0 %v1067
  %1085 = vmatpush.msra.mxu0 %v1066
  %1086 = vmatmul.f32.gmra.mxu0 %v744
  %v1087 = vpop.f32.mrf.mxu0
  %v1088 = vadd.f32 0.0, %v1087
  %1089 = vdwg.mxu0
  %v1090 = vld [vmem:[%s426] sm:$0xff]
  %v1091 = vld [vmem:[%s426 + $0x8] sm:$0xff]
  %v1092 = vld [vmem:[%s426 + $0x10] sm:$0xff]
  %v1093 = vld [vmem:[%s426 + $0x18] sm:$0xff]
  %1094 = vmatpush.msra.mxu0 0.0
  %1095 = vmatpush.msra.mxu0 0.0
  %1096 = vmatpush.msra.mxu0 0.0
  %1097 = vmatpush.msra.mxu0 0.0
  %1098 = vmatpush.msra.mxu0 0.0
  %1099 = vmatpush.msra.mxu0 0.0
  %1100 = vmatpush.msra.mxu0 0.0
  %1101 = vmatpush.msra.mxu0 0.0
  %1102 = vmatpush.msra.mxu0 0.0
  %1103 = vmatpush.msra.mxu0 0.0
  %1104 = vmatpush.msra.mxu0 0.0
  %1105 = vmatpush.msra.mxu0 0.0
  %1106 = vmatpush.msra.mxu0 %v1093
  %1107 = vmatpush.msra.mxu0 %v1092
  %1108 = vmatpush.msra.mxu0 %v1091
  %1109 = vmatpush.msra.mxu0 %v1090
  %1110 = vmatmul.f32.gmra.mxu0 %v771
  %v1111 = vpop.f32.mrf.mxu0
  %v1112 = vadd.f32 0.0, %v1111
  %1113 = vdwg.mxu0
  %v1115 = vsel %vm122, %v1064, 0
  %v1118 = vsel %vm122, %v1088, 0
  %1120 = vmatpush.xpose.msra.mxu0 0.0
  %1121 = vmatpush.xpose.msra.mxu0 0.0
  %1122 = vmatpush.xpose.msra.mxu0 0.0
  %1123 = vmatpush.xpose.msra.mxu0 0.0
  %1124 = vmatpush.xpose.msra.mxu0 0.0
  %1125 = vmatpush.xpose.msra.mxu0 0.0
  %1126 = vmatpush.xpose.msra.mxu0 0.0
  %1127 = vmatpush.xpose.msra.mxu0 0.0
  %1128 = vmatpush.xpose.msra.mxu0 0.0
  %1129 = vmatpush.xpose.msra.mxu0 0.0
  %1130 = vmatpush.xpose.msra.mxu0 0.0
  %1131 = vmatpush.xpose.msra.mxu0 0.0
  %1132 = vmatpush.xpose.msra.mxu0 0.0
  %1133 = vmatpush.xpose.msra.mxu0 0.0
  %1134 = vmatpush.xpose.msra.mxu0 0.0
  %1135 = vmatpush.xpose.msra.mxu0 %v1118
  %1136 = vmatmul.f32.gmra.mxu0 %v1115
  %v1137 = vpop.f32.mrf.mxu0
  %v1138 = vadd.f32 0.0, %v1137
  %1139 = vdwg.mxu0
  %v1140 = vmul.f32 %v1138, 0.35355338
  %v1141 = vadd.f32 %v1140, %v821
  %v1142 = vsel %vm122, %v1141, -inf
  %1143 = vmax.xlane.f32.xlu0 %v1142
  %v1144 = vpop.xlane.xlu0 %1143
  %v1145 = vsub.f32 %v1141, %v1144
  %v1146 = vmul.f32 %v1145, 1.442695
  %v1147 = vpow.pop %v1146
  %v1148 = vsel %vm122, %v1147, 0.0
  %1149 = vadd.xlane.f32.xlu0 %v1148
  %v1150 = vpop.xlane.xlu0 %1149
  %v1151 = vrcp.pop %v1150
  %v1152 = vmul.f32 %v1147, %v1151
  %v1154 = vsel %vm122, %v1152, 0
  %1156 = vmatpush.msra.mxu0 0.0
  %1157 = vmatpush.msra.mxu0 0.0
  %1158 = vmatpush.msra.mxu0 0.0
  %1159 = vmatpush.msra.mxu0 0.0
  %1160 = vmatpush.msra.mxu0 0.0
  %1161 = vmatpush.msra.mxu0 0.0
  %1162 = vmatpush.msra.mxu0 0.0
  %1163 = vmatpush.msra.mxu0 0.0
  %1164 = vmatpush.msra.mxu0 0.0
  %1165 = vmatpush.msra.mxu0 0.0
  %1166 = vmatpush.msra.mxu0 0.0
  %1167 = vmatpush.msra.mxu0 0.0
  %1168 = vmatpush.msra.mxu0 0.0
  %1169 = vmatpush.msra.mxu0 0.0
  %1170 = vmatpush.msra.mxu0 0.0
  %1171 = vmatpush.msra.mxu0 %v1112
  %1172 = vmatmul.f32.gmra.mxu0 %v1154
  %v1173 = vpop.f32.mrf.mxu0
  %v1174 = vadd.f32 0.0, %v1173
  %1175 = vdwg.mxu0
  %v1176 = vld [vmem:[%s513] sm:$0xff]
  %v1178 = vsel %vm122, %v1174, 0
  %1180 = vmatpush.msra.mxu0 0.0
  %1181 = vmatpush.msra.mxu0 0.0
  %1182 = vmatpush.msra.mxu0 0.0
  %1183 = vmatpush.msra.mxu0 0.0
  %1184 = vmatpush.msra.mxu0 0.0
  %1185 = vmatpush.msra.mxu0 0.0
  %1186 = vmatpush.msra.mxu0 0.0
  %1187 = vmatpush.msra.mxu0 0.0
  %1188 = vmatpush.msra.mxu0 0.0
  %1189 = vmatpush.msra.mxu0 0.0
  %1190 = vmatpush.msra.mxu0 0.0
  %1191 = vmatpush.msra.mxu0 0.0
  %1192 = vmatpush.msra.mxu0 0.0
  %1193 = vmatpush.msra.mxu0 0.0
  %1194 = vmatpush.msra.mxu0 0.0
  %1195 = vmatpush.msra.mxu0 %v1176
  %1196 = vmatmul.f32.gmra.mxu0 %v1178
  %v1197 = vpop.f32.mrf.mxu0
  %v1198 = vadd.f32 0.0, %v1197
  %1199 = vdwg.mxu0
  %v1200 = vadd.f32 %v1041, %v1198
  %v1201 = vld [vmem:[%s539] sm:$0xff]
  %v1202 = vld [vmem:[%s539 + $0x8] sm:$0xff]
  %v1203 = vld [vmem:[%s539 + $0x10] sm:$0xff]
  %v1204 = vld [vmem:[%s539 + $0x18] sm:$0xff]
  %1205 = vmatpush.msra.mxu0 0.0
  %1206 = vmatpush.msra.mxu0 0.0
  %1207 = vmatpush.msra.mxu0 0.0
  %1208 = vmatpush.msra.mxu0 0.0
  %1209 = vmatpush.msra.mxu0 0.0
  %1210 = vmatpush.msra.mxu0 0.0
  %1211 = vmatpush.msra.mxu0 0.0
  %1212 = vmatpush.msra.mxu0 0.0
  %1213 = vmatpush.msra.mxu0 0.0
  %1214 = vmatpush.msra.mxu0 0.0
  %1215 = vmatpush.msra.mxu0 0.0
  %1216 = vmatpush.msra.mxu0 0.0
  %1217 = vmatpush.msra.mxu0 %v1204
  %1218 = vmatpush.msra.mxu0 %v1203
  %1219 = vmatpush.msra.mxu0 %v1202
  %1220 = vmatpush.msra.mxu0 %v1201
  %1221 = vmatmul.f32.gmra.mxu0 %v717
  %v1222 = vpop.f32.mrf.mxu0
  %v1223 = vadd.f32 0.0, %v1222
  %1224 = vdwg.mxu0
  %v1225 = vld [vmem:[%s564] sm:$0xff]
  %v1226 = vld [vmem:[%s564 + $0x8] sm:$0xff]
  %v1227 = vld [vmem:[%s564 + $0x10] sm:$0xff]
  %v1228 = vld [vmem:[%s564 + $0x18] sm:$0xff]
  %1229 = vmatpush.msra.mxu0 0.0
  %1230 = vmatpush.msra.mxu0 0.0
  %1231 = vmatpush.msra.mxu0 0.0
  %1232 = vmatpush.msra.mxu0 0.0
  %1233 = vmatpush.msra.mxu0 0.0
  %1234 = vmatpush.msra.mxu0 0.0
  %1235 = vmatpush.msra.mxu0 0.0
  %1236 = vmatpush.msra.mxu0 0.0
  %1237 = vmatpush.msra.mxu0 0.0
  %1238 = vmatpush.msra.mxu0 0.0
  %1239 = vmatpush.msra.mxu0 0.0
  %1240 = vmatpush.msra.mxu0 0.0
  %1241 = vmatpush.msra.mxu0 %v1228
  %1242 = vmatpush.msra.mxu0 %v1227
  %1243 = vmatpush.msra.mxu0 %v1226
  %1244 = vmatpush.msra.mxu0 %v1225
  %1245 = vmatmul.f32.gmra.mxu0 %v744
  %v1246 = vpop.f32.mrf.mxu0
  %v1247 = vadd.f32 0.0, %v1246
  %1248 = vdwg.mxu0
  %v1249 = vld [vmem:[%s589] sm:$0xff]
  %v1250 = vld [vmem:[%s589 + $0x8] sm:$0xff]
  %v1251 = vld [vmem:[%s589 + $0x10] sm:$0xff]
  %v1252 = vld [vmem:[%s589 + $0x18] sm:$0xff]
  %1253 = vmatpush.msra.mxu0 0.0
  %1254 = vmatpush.msra.mxu0 0.0
  %1255 = vmatpush.msra.mxu0 0.0
  %1256 = vmatpush.msra.mxu0 0.0
  %1257 = vmatpush.msra.mxu0 0.0
  %1258 = vmatpush.msra.mxu0 0.0
  %1259 = vmatpush.msra.mxu0 0.0
  %1260 = vmatpush.msra.mxu0 0.0
  %1261 = vmatpush.msra.mxu0 0.0
  %1262 = vmatpush.msra.mxu0 0.0
  %1263 = vmatpush.msra.mxu0 0.0
  %1264 = vmatpush.msra.mxu0 0.0
  %1265 = vmatpush.msra.mxu0 %v1252
  %1266 = vmatpush.msra.mxu0 %v1251
  %1267 = vmatpush.msra.mxu0 %v1250
  %1268 = vmatpush.msra.mxu0 %v1249
  %1269 = vmatmul.f32.gmra.mxu0 %v771
  %v1270 = vpop.f32.mrf.mxu0
  %v1271 = vadd.f32 0.0, %v1270
  %1272 = vdwg.mxu0
  %v1274 = vsel %vm122, %v1223, 0
  %v1277 = vsel %vm122, %v1247, 0
  %1279 = vmatpush.xpose.msra.mxu0 0.0
  %1280 = vmatpush.xpose.msra.mxu0 0.0
  %1281 = vmatpush.xpose.msra.mxu0 0.0
  %1282 = vmatpush.xpose.msra.mxu0 0.0
  %1283 = vmatpush.xpose.msra.mxu0 0.0
  %1284 = vmatpush.xpose.msra.mxu0 0.0
  %1285 = vmatpush.xpose.msra.mxu0 0.0
  %1286 = vmatpush.xpose.msra.mxu0 0.0
  %1287 = vmatpush.xpose.msra.mxu0 0.0
  %1288 = vmatpush.xpose.msra.mxu0 0.0
  %1289 = vmatpush.xpose.msra.mxu0 0.0
  %1290 = vmatpush.xpose.msra.mxu0 0.0
  %1291 = vmatpush.xpose.msra.mxu0 0.0
  %1292 = vmatpush.xpose.msra.mxu0 0.0
  %1293 = vmatpush.xpose.msra.mxu0 0.0
  %1294 = vmatpush.xpose.msra.mxu0 %v1277
  %1295 = vmatmul.f32.gmra.mxu0 %v1274
  %v1296 = vpop.f32.mrf.mxu0
  %v1297 = vadd.f32 0.0, %v1296
  %1298 = vdwg.mxu0
  %v1299 = vmul.f32 %v1297, 0.35355338
  %v1300 = vadd.f32 %v1299, %v821
  %v1301 = vsel %vm122, %v1300, -inf
  %1302 = vmax.xlane.f32.xlu0 %v1301
  %v1303 = vpop.xlane.xlu0 %1302
  %v1304 = vsub.f32 %v1300, %v1303
  %v1305 = vmul.f32 %v1304, 1.442695
  %v1306 = vpow.pop %v1305
  %v1307 = vsel %vm122, %v1306, 0.0
  %1308 = vadd.xlane.f32.xlu0 %v1307
  %v1309 = vpop.xlane.xlu0 %1308
  %v1310 = vrcp.pop %v1309
  %v1311 = vmul.f32 %v1306, %v1310
  %v1313 = vsel %vm122, %v1311, 0
  %1315 = vmatpush.msra.mxu0 0.0
  %1316 = vmatpush.msra.mxu0 0.0
  %1317 = vmatpush.msra.mxu0 0.0
  %1318 = vmatpush.msra.mxu0 0.0
  %1319 = vmatpush.msra.mxu0 0.0
  %1320 = vmatpush.msra.mxu0 0.0
  %1321 = vmatpush.msra.mxu0 0.0
  %1322 = vmatpush.msra.mxu0 0.0
  %1323 = vmatpush.msra.mxu0 0.0
  %1324 = vmatpush.msra.mxu0 0.0
  %1325 = vmatpush.msra.mxu0 0.0
  %1326 = vmatpush.msra.mxu0 0.0
  %1327 = vmatpush.msra.mxu0 0.0
  %1328 = vmatpush.msra.mxu0 0.0
  %1329 = vmatpush.msra.mxu0 0.0
  %1330 = vmatpush.msra.mxu0 %v1271
  %1331 = vmatmul.f32.gmra.mxu0 %v1313
  %v1332 = vpop.f32.mrf.mxu0
  %v1333 = vadd.f32 0.0, %v1332
  %1334 = vdwg.mxu0
  %v1335 = vld [vmem:[%s676] sm:$0xff]
  %v1337 = vsel %vm122, %v1333, 0
  %1339 = vmatpush.msra.mxu0 0.0
  %1340 = vmatpush.msra.mxu0 0.0
  %1341 = vmatpush.msra.mxu0 0.0
  %1342 = vmatpush.msra.mxu0 0.0
  %1343 = vmatpush.msra.mxu0 0.0
  %1344 = vmatpush.msra.mxu0 0.0
  %1345 = vmatpush.msra.mxu0 0.0
  %1346 = vmatpush.msra.mxu0 0.0
  %1347 = vmatpush.msra.mxu0 0.0
  %1348 = vmatpush.msra.mxu0 0.0
  %1349 = vmatpush.msra.mxu0 0.0
  %1350 = vmatpush.msra.mxu0 0.0
  %1351 = vmatpush.msra.mxu0 0.0
  %1352 = vmatpush.msra.mxu0 0.0
  %1353 = vmatpush.msra.mxu0 0.0
  %1354 = vmatpush.msra.mxu0 %v1335
  %1355 = vmatmul.f32.gmra.mxu0 %v1337
  %v1356 = vpop.f32.mrf.mxu0
  %v1357 = vadd.f32 0.0, %v1356
  %1358 = vdwg.mxu0
  %v1359 = vadd.f32 %v1200, %v1357
  %1360 = vst [vmem:[%s9 + $0x8] sm:$0xff] %v1359
  // Predicated region
  $region38: #{mha_forward.1} parent=0 // pred_check
    _
  $region39: #{mha_forward.1} parent=0 // pred_check_branch
    %1362 = sbr.rel (0) target = $region41
  $region40: #{mha_forward.1} parent=0 // pred_region
    _
  $region41: #{mha_forward.1} parent=0 // pred_fallthru
    _
  // Predicated region
  $region42: #{mha_forward.1} parent=0 // pred_check
    _
  $region43: #{mha_forward.1} parent=0 // pred_check_branch
    %1364 = sbr.rel (0) target = $region45
  $region44: #{mha_forward.1} parent=0 // pred_region
    _
  $region45: #{mha_forward.1} parent=0 // pred_fallthru
    _

</llo_original>
